<compile_context>
chip_gen: v7x
topology: tpu7x:2x2x1
jax: 0.10.0
libtpu: 0.0.40
codegen_flags: <defaults>
</compile_context>

<pallas_src>
import jax
import jax.numpy as jnp
from jax.experimental import pallas as pl
from jax.experimental.pallas import tpu as pltpu


# ----------------------------------------------------------------------------
# Kernel
# ----------------------------------------------------------------------------
def _discriminator_kernel(x_ref,
                          w1_ref, b1_ref,
                          w2_ref, b2_ref,
                          w3_ref, b3_ref,
                          w4_ref, b4_ref,
                          o_ref):
    """Fused 4-layer MLP forward on one (TM, Kp) batch tile.

    x and w1..w3 are bf16 (MXU-native); accumulation, bias-add and LeakyReLU
    are f32. fc4 (128 -> 1) is a VPU multiply + lane reduction (a 1-column
    matmul would waste the MXU pass). Output is stored lane-dense as (1,1,TM).
    """
    neg_slope = jnp.float32(0.2)

    def leaky_relu(v):  # max(v, 0.2*v) == LeakyReLU(0.2) for v in f32
        return jnp.maximum(v, neg_slope * v)

    # fc1 + LeakyReLU  (MXU, bf16 in / f32 acc)
    h = jnp.dot(x_ref[...], w1_ref[...],
                preferred_element_type=jnp.float32) + b1_ref[...]
    h = leaky_relu(h)

    # fc2 + LeakyReLU
    h = jnp.dot(h.astype(jnp.bfloat16), w2_ref[...],
                preferred_element_type=jnp.float32) + b2_ref[...]
    h = leaky_relu(h)

    # fc3 + LeakyReLU
    h = jnp.dot(h.astype(jnp.bfloat16), w3_ref[...],
                preferred_element_type=jnp.float32) + b3_ref[...]
    h = leaky_relu(h)

    # fc4 (128 -> 1): VPU multiply + XLU lane reduction, then transpose to a
    # lane-dense (1, TM) row for an unmasked store.
    out = jnp.sum(h * w4_ref[...], axis=-1, keepdims=True)      # (TM, 1) f32
    out = out.T + b4_ref[...]                                    # (1, TM)
    o_ref[...] = out.reshape(o_ref.shape).astype(o_ref.dtype)


# ----------------------------------------------------------------------------
# Wrapper helpers
# ----------------------------------------------------------------------------
def prepare_params(params):
    """One-time layout prep (hoist out of the per-step forward):
    pad w1 along K to a lane multiple, cast MXU weights to bf16, store fc4's
    weight as a (1, 128) row and biases as (1, out) f32 rows."""
    K = params["w1"].shape[0]
    assert params["w1"].shape == (K, 512)
    assert params["w2"].shape == (512, 256)
    assert params["w3"].shape == (256, 128)
    assert params["w4"].shape == (128, 1), "fc4 weight must be stored as (128, 1)"

    Kp = ((K + 127) // 128) * 128
    w1 = params["w1"].astype(jnp.bfloat16)
    if Kp != K:
        w1 = jnp.zeros((Kp, 512), jnp.bfloat16).at[:K, :].set(w1)

    return {
        "K": K, "Kp": Kp,
        "w1": w1,
        "w2": params["w2"].astype(jnp.bfloat16),
        "w3": params["w3"].astype(jnp.bfloat16),
        "w4": params["w4"].reshape(1, 128).astype(jnp.float32),
        "b1": params["b1"].reshape(1, 512).astype(jnp.float32),
        "b2": params["b2"].reshape(1, 256).astype(jnp.float32),
        "b3": params["b3"].reshape(1, 128).astype(jnp.float32),
        "b4": params["b4"].reshape(1, 1).astype(jnp.float32),
    }


def _vmem_limit_bytes():
    """Generation-aware scoped-VMEM limit: ~48 MiB on v7x (64 MiB physical),
    ~96 MiB on v5e/v6e (128 MiB physical); safe fallback if query fails."""
    cap = 64 << 20
    try:
        cap = pltpu.get_tpu_info().vmem_capacity_bytes
    except Exception:
        pass
    return int(min(max(cap - (16 << 20), 32 << 20), 96 << 20))


def _choose_tm(B, Kp, vmem_limit):
    """Pick a batch tile size that fits the VMEM budget and keeps the MXU fed.
    Ensures >= 2 grid steps for large batches (v7x megacore)."""
    # Weights/biases (bf16 weights, f32 bias rows + fc4 row); x2 in case the
    # single-buffering request is not honored.
    weight_bytes = 2 * (2 * (Kp * 512 + 512 * 256 + 256 * 128)
                        + 4 * (512 + 256 + 128 + 128 + 1))
    # Per batch-row VMEM: double-buffered bf16 x tile + f32 intermediates.
    per_row = 2 * (2 * Kp) + 4 * (512 + 512 + 256 + 128)
    avail = vmem_limit - weight_bytes - (4 << 20)        # headroom
    tm_cap = max(8, avail // per_row)

    b8 = ((B + 7) // 8) * 8                              # sublane-aligned batch
    tm = int(min(1024, tm_cap))
    if tm >= b8:
        if b8 >= 256:
            # One tile would cover the whole batch: split in two so the
            # "parallel" grid axis can use both v7x TensorCores.
            tm = ((b8 // 2 + 7) // 8) * 8
        else:
            tm = b8
    else:
        tm = max(8, (tm // 128) * 128) if tm >= 128 else max(8, (tm // 8) * 8)
    return tm


# ----------------------------------------------------------------------------
# Forward
# ----------------------------------------------------------------------------
def discriminator_forward(x, prepped):
    """x: (B, shape1) float. prepped: output of prepare_params.
    Returns (B,) float32, matching torch's out.view(-1)."""
    B, K = x.shape
    assert K == prepped["K"], f"expected input width {prepped['K']}, got {K}"
    Kp = prepped["Kp"]
    # TODO(synk): for very large shape1 (w1 alone > VMEM) add a K grid axis
    # ('arbitrary', last) with an fc1 f32 accumulator so x blocks are (TM, TK).

    vmem_limit = _vmem_limit_bytes()
    TM = _choose_tm(B, Kp, vmem_limit)
    num_tiles = (B + TM - 1) // TM
    Bp = num_tiles * TM

    # x as bf16: pad + cast fused; skip the padded copy entirely when aligned.
    xb = x.astype(jnp.bfloat16)
    if (Bp, Kp) != (B, K):
        xb = jnp.zeros((Bp, Kp), jnp.bfloat16).at[:B, :K].set(xb)

    w_args = (prepped["w1"], prepped["b1"], prepped["w2"], prepped["b2"],
              prepped["w3"], prepped["b3"], prepped["w4"], prepped["b4"])

    def run(single_buffer_weights):
        if single_buffer_weights:
            resident = lambda a: pl.BlockSpec(
                a.shape, lambda i: (0,) * a.ndim,
                pipeline_mode=pl.Buffered(1))
        else:
            resident = lambda a: pl.BlockSpec(a.shape, lambda i: (0,) * a.ndim)

        return pl.pallas_call(
            _discriminator_kernel,
            out_shape=jax.ShapeDtypeStruct((num_tiles, 1, TM), jnp.float32),
            grid=(num_tiles,),
            in_specs=[
                pl.BlockSpec((TM, Kp), lambda i: (i, 0)),   # x: tiled over batch
                *(resident(a) for a in w_args),             # VMEM-resident weights
            ],
            out_specs=pl.BlockSpec((1, 1, TM), lambda i: (i, 0, 0)),  # lane-dense
            compiler_params=pltpu.CompilerParams(
                dimension_semantics=("parallel",),
                vmem_limit_bytes=vmem_limit,
            ),
        )(xb, *w_args)

    try:
        out = run(True)        # single-buffered resident weights (saves VMEM)
    except Exception:          # pipeline_mode / Buffered(1) unsupported
        out = run(False)

    return out.reshape(-1)[:B]  # == torch out.view(-1)


# ----------------------------------------------------------------------------
# Init + reference
# ----------------------------------------------------------------------------
def init_params(key, shape1):
    """Uniform init like PyTorch's default Linear init.
    Weights stored as (fan_in, fan_out); biases as (1, fan_out). f32."""
    dims = [(shape1, 512), (512, 256), (256, 128), (128, 1)]
    params = {}
    for i, (fin, fout) in enumerate(dims, start=1):
        key, kw, kb = jax.random.split(key, 3)
        bound = 1.0 / jnp.sqrt(jnp.float32(fin))
        params[f"w{i}"] = jax.random.uniform(
            kw, (fin, fout), jnp.float32, minval=-bound, maxval=bound)
        params[f"b{i}"] = jax.random.uniform(
            kb, (1, fout), jnp.float32, minval=-bound, maxval=bound)
    return params


def _reference_forward(x, params):
    """Plain-JAX f32 reference (mirrors the torch module)."""
    lrelu = lambda v: jnp.where(v > 0, v, 0.2 * v)
    h = lrelu(x @ params["w1"] + params["b1"])
    h = lrelu(h @ params["w2"] + params["b2"])
    h = lrelu(h @ params["w3"] + params["b3"])
    out = h @ params["w4"] + params["b4"]
    return out.reshape(-1)


if __name__ == "__main__":
    key = jax.random.PRNGKey(0)
    k_x, k_p = jax.random.split(key)

    B, shape1 = 8, 32  # small demo shapes consistent with Linear(shape1, 512)
    x = jax.random.normal(k_x, (B, shape1), jnp.float32)
    params = init_params(k_p, shape1)
    prepped = prepare_params(params)   # one-time layout prep (hoisted)

    y = jax.block_until_ready(discriminator_forward(x, prepped))
    y_ref = _reference_forward(x, params)

    assert y.shape == (B,)
    # bf16 MXU inputs with f32 accumulation -> loosened tolerance vs f32 ref.
    assert jnp.allclose(y, y_ref, atol=2e-2, rtol=2e-2), (y, y_ref)

    print("KERNEL_OK")
</pallas_src>

<mosaic_0001>
module attributes {stable_mosaic.version = 11 : i64} {
  func.func @_discriminator_kernel(%arg0: i32, %arg1: memref<8x128xbf16, #tpu.memory_space<vmem>>, %arg2: memref<128x512xbf16, #tpu.memory_space<vmem>>, %arg3: memref<1x512xf32, #tpu.memory_space<vmem>>, %arg4: memref<512x256xbf16, #tpu.memory_space<vmem>>, %arg5: memref<1x256xf32, #tpu.memory_space<vmem>>, %arg6: memref<256x128xbf16, #tpu.memory_space<vmem>>, %arg7: memref<1x128xf32, #tpu.memory_space<vmem>>, %arg8: memref<1x128xf32, #tpu.memory_space<vmem>>, %arg9: memref<1x1xf32, #tpu.memory_space<vmem>>, %arg10: memref<1x1x8xf32, #tpu.memory_space<vmem>>) attributes {dimension_semantics = [#tpu.dimension_semantics<parallel>], iteration_bounds = array<i64: 1>, scalar_prefetch = 0 : i64, scratch_operands = 0 : i64, tpu.core_type = #tpu.core_type<tc>, window_params = [{transform_indices = @transform_0, window_bounds = array<i64: 8, 128>}, {pipeline_mode = #tpu.pipeline_mode<synchronous>, transform_indices = @transform_1, window_bounds = array<i64: 128, 512>}, {pipeline_mode = #tpu.pipeline_mode<synchronous>, transform_indices = @transform_2, window_bounds = array<i64: 1, 512>}, {pipeline_mode = #tpu.pipeline_mode<synchronous>, transform_indices = @transform_3, window_bounds = array<i64: 512, 256>}, {pipeline_mode = #tpu.pipeline_mode<synchronous>, transform_indices = @transform_4, window_bounds = array<i64: 1, 256>}, {pipeline_mode = #tpu.pipeline_mode<synchronous>, transform_indices = @transform_5, window_bounds = array<i64: 256, 128>}, {pipeline_mode = #tpu.pipeline_mode<synchronous>, transform_indices = @transform_6, window_bounds = array<i64: 1, 128>}, {pipeline_mode = #tpu.pipeline_mode<synchronous>, transform_indices = @transform_7, window_bounds = array<i64: 1, 128>}, {pipeline_mode = #tpu.pipeline_mode<synchronous>, transform_indices = @transform_8, window_bounds = array<i64: 1, 1>}, {transform_indices = @transform_9, window_bounds = array<i64: 1, 1, 8>}]} {
    %c0 = arith.constant 0 : index
    %c0_0 = arith.constant 0 : index
    %0 = vector.load %arg1[%c0, %c0_0] : memref<8x128xbf16, #tpu.memory_space<vmem>>, vector<8x128xbf16>
    %c0_1 = arith.constant 0 : index
    %c0_2 = arith.constant 0 : index
    %1 = vector.load %arg2[%c0_1, %c0_2] : memref<128x512xbf16, #tpu.memory_space<vmem>>, vector<128x512xbf16>
    %cst = arith.constant dense<0.000000e+00> : vector<8x512xf32>
    %2 = tpu.matmul %0, %1, %cst {dimension_numbers = #tpu.dot_dimension_numbers<[1], [0], [0], [1], [0, 0, 1, 1], [], []>} : vector<8x128xbf16>, vector<128x512xbf16>, vector<8x512xf32> -> vector<8x512xf32>
    %c0_3 = arith.constant 0 : index
    %c0_4 = arith.constant 0 : index
    %3 = vector.load %arg3[%c0_3, %c0_4] : memref<1x512xf32, #tpu.memory_space<vmem>>, vector<1x512xf32>
    %4 = vector.broadcast %3 : vector<1x512xf32> to vector<8x512xf32>
    %5 = arith.addf %2, %4 : vector<8x512xf32>
    %cst_5 = arith.constant 2.000000e-01 : f32
    %6 = vector.broadcast %cst_5 : f32 to vector<8x512xf32>
    %7 = arith.mulf %6, %5 : vector<8x512xf32>
    %8 = arith.maximumf %5, %7 : vector<8x512xf32>
    %9 = arith.truncf %8 : vector<8x512xf32> to vector<8x512xbf16>
    %c0_6 = arith.constant 0 : index
    %c0_7 = arith.constant 0 : index
    %10 = vector.load %arg4[%c0_6, %c0_7] : memref<512x256xbf16, #tpu.memory_space<vmem>>, vector<512x256xbf16>
    %cst_8 = arith.constant dense<0.000000e+00> : vector<8x256xf32>
    %11 = tpu.matmul %9, %10, %cst_8 {dimension_numbers = #tpu.dot_dimension_numbers<[1], [0], [0], [1], [0, 0, 1, 1], [], []>} : vector<8x512xbf16>, vector<512x256xbf16>, vector<8x256xf32> -> vector<8x256xf32>
    %c0_9 = arith.constant 0 : index
    %c0_10 = arith.constant 0 : index
    %12 = vector.load %arg5[%c0_9, %c0_10] : memref<1x256xf32, #tpu.memory_space<vmem>>, vector<1x256xf32>
    %13 = vector.broadcast %12 : vector<1x256xf32> to vector<8x256xf32>
    %14 = arith.addf %11, %13 : vector<8x256xf32>
    %cst_11 = arith.constant 2.000000e-01 : f32
    %15 = vector.broadcast %cst_11 : f32 to vector<8x256xf32>
    %16 = arith.mulf %15, %14 : vector<8x256xf32>
    %17 = arith.maximumf %14, %16 : vector<8x256xf32>
    %18 = arith.truncf %17 : vector<8x256xf32> to vector<8x256xbf16>
    %c0_12 = arith.constant 0 : index
    %c0_13 = arith.constant 0 : index
    %19 = vector.load %arg6[%c0_12, %c0_13] : memref<256x128xbf16, #tpu.memory_space<vmem>>, vector<256x128xbf16>
    %cst_14 = arith.constant dense<0.000000e+00> : vector<8x128xf32>
    %20 = tpu.matmul %18, %19, %cst_14 {dimension_numbers = #tpu.dot_dimension_numbers<[1], [0], [0], [1], [0, 0, 1, 1], [], []>} : vector<8x256xbf16>, vector<256x128xbf16>, vector<8x128xf32> -> vector<8x128xf32>
    %c0_15 = arith.constant 0 : index
    %c0_16 = arith.constant 0 : index
    %21 = vector.load %arg7[%c0_15, %c0_16] : memref<1x128xf32, #tpu.memory_space<vmem>>, vector<1x128xf32>
    %22 = vector.broadcast %21 : vector<1x128xf32> to vector<8x128xf32>
    %23 = arith.addf %20, %22 : vector<8x128xf32>
    %cst_17 = arith.constant 2.000000e-01 : f32
    %24 = vector.broadcast %cst_17 : f32 to vector<8x128xf32>
    %25 = arith.mulf %24, %23 : vector<8x128xf32>
    %26 = arith.maximumf %23, %25 : vector<8x128xf32>
    %c0_18 = arith.constant 0 : index
    %c0_19 = arith.constant 0 : index
    %27 = vector.load %arg8[%c0_18, %c0_19] : memref<1x128xf32, #tpu.memory_space<vmem>>, vector<1x128xf32>
    %28 = vector.broadcast %27 : vector<1x128xf32> to vector<8x128xf32>
    %29 = arith.mulf %26, %28 : vector<8x128xf32>
    %cst_20 = arith.constant dense<0.000000e+00> : vector<8xf32>
    %30 = vector.multi_reduction <add>, %29, %cst_20 [1] : vector<8x128xf32> to vector<8xf32>
    %31 = vector.shape_cast %30 : vector<8xf32> to vector<8x1xf32>
    %32 = tpu.transpose %31, [1, 0] : vector<8x1xf32> -> vector<1x8xf32>
    %c0_21 = arith.constant 0 : index
    %c0_22 = arith.constant 0 : index
    %33 = vector.load %arg9[%c0_21, %c0_22] : memref<1x1xf32, #tpu.memory_space<vmem>>, vector<1x1xf32>
    %34 = vector.broadcast %33 : vector<1x1xf32> to vector<1x8xf32>
    %35 = arith.addf %32, %34 : vector<1x8xf32>
    %36 = vector.shape_cast %35 : vector<1x8xf32> to vector<1x1x8xf32>
    %c0_23 = arith.constant 0 : index
    %c0_24 = arith.constant 0 : index
    %c0_25 = arith.constant 0 : index
    %37 = vector.load %arg10[%c0_23, %c0_24, %c0_25] : memref<1x1x8xf32, #tpu.memory_space<vmem>>, vector<1x1x8xf32>
    tpu.vector_store %arg10[%c0_23, %c0_24, %c0_25], %36 {strides = array<i32>} : memref<1x1x8xf32, #tpu.memory_space<vmem>>, vector<1x1x8xf32>,
    return
  }
  func.func @transform_0(%arg0: i32) -> (i32, i32) {
    %c0_i32 = arith.constant 0 : i32
    %c0_i32_0 = arith.constant 0 : i32
    return %arg0, %c0_i32 : i32, i32
  }
  func.func @transform_1(%arg0: i32) -> (i32, i32) {
    %c0_i32 = arith.constant 0 : i32
    %c0_i32_0 = arith.constant 0 : i32
    %c0_i32_1 = arith.constant 0 : i32
    return %c0_i32, %c0_i32_0 : i32, i32
  }
  func.func @transform_2(%arg0: i32) -> (i32, i32) {
    %c0_i32 = arith.constant 0 : i32
    %c0_i32_0 = arith.constant 0 : i32
    %c0_i32_1 = arith.constant 0 : i32
    return %c0_i32, %c0_i32_0 : i32, i32
  }
  func.func @transform_3(%arg0: i32) -> (i32, i32) {
    %c0_i32 = arith.constant 0 : i32
    %c0_i32_0 = arith.constant 0 : i32
    %c0_i32_1 = arith.constant 0 : i32
    return %c0_i32, %c0_i32_0 : i32, i32
  }
  func.func @transform_4(%arg0: i32) -> (i32, i32) {
    %c0_i32 = arith.constant 0 : i32
    %c0_i32_0 = arith.constant 0 : i32
    %c0_i32_1 = arith.constant 0 : i32
    return %c0_i32, %c0_i32_0 : i32, i32
  }
  func.func @transform_5(%arg0: i32) -> (i32, i32) {
    %c0_i32 = arith.constant 0 : i32
    %c0_i32_0 = arith.constant 0 : i32
    %c0_i32_1 = arith.constant 0 : i32
    return %c0_i32, %c0_i32_0 : i32, i32
  }
  func.func @transform_6(%arg0: i32) -> (i32, i32) {
    %c0_i32 = arith.constant 0 : i32
    %c0_i32_0 = arith.constant 0 : i32
    %c0_i32_1 = arith.constant 0 : i32
    return %c0_i32, %c0_i32_0 : i32, i32
  }
  func.func @transform_7(%arg0: i32) -> (i32, i32) {
    %c0_i32 = arith.constant 0 : i32
    %c0_i32_0 = arith.constant 0 : i32
    %c0_i32_1 = arith.constant 0 : i32
    return %c0_i32, %c0_i32_0 : i32, i32
  }
  func.func @transform_8(%arg0: i32) -> (i32, i32) {
    %c0_i32 = arith.constant 0 : i32
    %c0_i32_0 = arith.constant 0 : i32
    %c0_i32_1 = arith.constant 0 : i32
    return %c0_i32, %c0_i32_0 : i32, i32
  }
  func.func @transform_9(%arg0: i32) -> (i32, i32, i32) {
    %c0_i32 = arith.constant 0 : i32
    %c0_i32_0 = arith.constant 0 : i32
    %c0_i32_1 = arith.constant 0 : i32
    return %arg0, %c0_i32, %c0_i32_0 : i32, i32, i32
  }
}

module attributes {stable_mosaic.version = 11 : i64} {
  func.func @_discriminator_kernel(%arg0: i32, %arg1: memref<8x128xbf16, #tpu.memory_space<vmem>>, %arg2: memref<128x512xbf16, #tpu.memory_space<vmem>>, %arg3: memref<1x512xf32, #tpu.memory_space<vmem>>, %arg4: memref<512x256xbf16, #tpu.memory_space<vmem>>, %arg5: memref<1x256xf32, #tpu.memory_space<vmem>>, %arg6: memref<256x128xbf16, #tpu.memory_space<vmem>>, %arg7: memref<1x128xf32, #tpu.memory_space<vmem>>, %arg8: memref<1x128xf32, #tpu.memory_space<vmem>>, %arg9: memref<1x1xf32, #tpu.memory_space<vmem>>, %arg10: memref<1x1x8xf32, #tpu.memory_space<vmem>>) attributes {dimension_semantics = [#tpu.dimension_semantics<parallel>], iteration_bounds = array<i64: 1>, scalar_prefetch = 0 : i64, scratch_operands = 0 : i64, tpu.core_type = #tpu.core_type<tc>, window_params = [{transform_indices = @transform_0, window_bounds = array<i64: 8, 128>}, {pipeline_mode = #tpu.pipeline_mode<synchronous>, transform_indices = @transform_1, window_bounds = array<i64: 128, 512>}, {pipeline_mode = #tpu.pipeline_mode<synchronous>, transform_indices = @transform_2, window_bounds = array<i64: 1, 512>}, {pipeline_mode = #tpu.pipeline_mode<synchronous>, transform_indices = @transform_3, window_bounds = array<i64: 512, 256>}, {pipeline_mode = #tpu.pipeline_mode<synchronous>, transform_indices = @transform_4, window_bounds = array<i64: 1, 256>}, {pipeline_mode = #tpu.pipeline_mode<synchronous>, transform_indices = @transform_5, window_bounds = array<i64: 256, 128>}, {pipeline_mode = #tpu.pipeline_mode<synchronous>, transform_indices = @transform_6, window_bounds = array<i64: 1, 128>}, {pipeline_mode = #tpu.pipeline_mode<synchronous>, transform_indices = @transform_7, window_bounds = array<i64: 1, 128>}, {pipeline_mode = #tpu.pipeline_mode<synchronous>, transform_indices = @transform_8, window_bounds = array<i64: 1, 1>}, {transform_indices = @transform_9, window_bounds = array<i64: 1, 1, 8>}]} {
    %c0 = arith.constant 0 : index
    %c0_0 = arith.constant 0 : index
    %0 = vector.load %arg1[%c0, %c0_0] : memref<8x128xbf16, #tpu.memory_space<vmem>>, vector<8x128xbf16>
    %c0_1 = arith.constant 0 : index
    %c0_2 = arith.constant 0 : index
    %1 = vector.load %arg2[%c0_1, %c0_2] : memref<128x512xbf16, #tpu.memory_space<vmem>>, vector<128x512xbf16>
    %cst = arith.constant dense<0.000000e+00> : vector<8x512xf32>
    %2 = tpu.matmul %0, %1, %cst {dimension_numbers = #tpu.dot_dimension_numbers<[1], [0], [0], [1], [0, 0, 1, 1], [], []>} : vector<8x128xbf16>, vector<128x512xbf16>, vector<8x512xf32> -> vector<8x512xf32>
    %c0_3 = arith.constant 0 : index
    %c0_4 = arith.constant 0 : index
    %3 = vector.load %arg3[%c0_3, %c0_4] : memref<1x512xf32, #tpu.memory_space<vmem>>, vector<1x512xf32>
    %4 = vector.broadcast %3 : vector<1x512xf32> to vector<8x512xf32>
    %5 = arith.addf %2, %4 : vector<8x512xf32>
    %cst_5 = arith.constant 2.000000e-01 : f32
    %6 = vector.broadcast %cst_5 : f32 to vector<8x512xf32>
    %7 = arith.mulf %6, %5 : vector<8x512xf32>
    %8 = arith.maximumf %5, %7 : vector<8x512xf32>
    %9 = arith.truncf %8 : vector<8x512xf32> to vector<8x512xbf16>
    %c0_6 = arith.constant 0 : index
    %c0_7 = arith.constant 0 : index
    %10 = vector.load %arg4[%c0_6, %c0_7] : memref<512x256xbf16, #tpu.memory_space<vmem>>, vector<512x256xbf16>
    %cst_8 = arith.constant dense<0.000000e+00> : vector<8x256xf32>
    %11 = tpu.matmul %9, %10, %cst_8 {dimension_numbers = #tpu.dot_dimension_numbers<[1], [0], [0], [1], [0, 0, 1, 1], [], []>} : vector<8x512xbf16>, vector<512x256xbf16>, vector<8x256xf32> -> vector<8x256xf32>
    %c0_9 = arith.constant 0 : index
    %c0_10 = arith.constant 0 : index
    %12 = vector.load %arg5[%c0_9, %c0_10] : memref<1x256xf32, #tpu.memory_space<vmem>>, vector<1x256xf32>
    %13 = vector.broadcast %12 : vector<1x256xf32> to vector<8x256xf32>
    %14 = arith.addf %11, %13 : vector<8x256xf32>
    %cst_11 = arith.constant 2.000000e-01 : f32
    %15 = vector.broadcast %cst_11 : f32 to vector<8x256xf32>
    %16 = arith.mulf %15, %14 : vector<8x256xf32>
    %17 = arith.maximumf %14, %16 : vector<8x256xf32>
    %18 = arith.truncf %17 : vector<8x256xf32> to vector<8x256xbf16>
    %c0_12 = arith.constant 0 : index
    %c0_13 = arith.constant 0 : index
    %19 = vector.load %arg6[%c0_12, %c0_13] : memref<256x128xbf16, #tpu.memory_space<vmem>>, vector<256x128xbf16>
    %cst_14 = arith.constant dense<0.000000e+00> : vector<8x128xf32>
    %20 = tpu.matmul %18, %19, %cst_14 {dimension_numbers = #tpu.dot_dimension_numbers<[1], [0], [0], [1], [0, 0, 1, 1], [], []>} : vector<8x256xbf16>, vector<256x128xbf16>, vector<8x128xf32> -> vector<8x128xf32>
    %c0_15 = arith.constant 0 : index
    %c0_16 = arith.constant 0 : index
    %21 = vector.load %arg7[%c0_15, %c0_16] : memref<1x128xf32, #tpu.memory_space<vmem>>, vector<1x128xf32>
    %22 = vector.broadcast %21 : vector<1x128xf32> to vector<8x128xf32>
    %23 = arith.addf %20, %22 : vector<8x128xf32>
    %cst_17 = arith.constant 2.000000e-01 : f32
    %24 = vector.broadcast %cst_17 : f32 to vector<8x128xf32>
    %25 = arith.mulf %24, %23 : vector<8x128xf32>
    %26 = arith.maximumf %23, %25 : vector<8x128xf32>
    %c0_18 = arith.constant 0 : index
    %c0_19 = arith.constant 0 : index
    %27 = vector.load %arg8[%c0_18, %c0_19] : memref<1x128xf32, #tpu.memory_space<vmem>>, vector<1x128xf32>
    %28 = vector.broadcast %27 : vector<1x128xf32> to vector<8x128xf32>
    %29 = arith.mulf %26, %28 : vector<8x128xf32>
    %cst_20 = arith.constant dense<0.000000e+00> : vector<8xf32>
    %30 = vector.multi_reduction <add>, %29, %cst_20 [1] : vector<8x128xf32> to vector<8xf32>
    %31 = vector.shape_cast %30 : vector<8xf32> to vector<8x1xf32>
    %32 = tpu.transpose %31, [1, 0] : vector<8x1xf32> -> vector<1x8xf32>
    %c0_21 = arith.constant 0 : index
    %c0_22 = arith.constant 0 : index
    %33 = vector.load %arg9[%c0_21, %c0_22] : memref<1x1xf32, #tpu.memory_space<vmem>>, vector<1x1xf32>
    %34 = vector.broadcast %33 : vector<1x1xf32> to vector<1x8xf32>
    %35 = arith.addf %32, %34 : vector<1x8xf32>
    %36 = vector.shape_cast %35 : vector<1x8xf32> to vector<1x1x8xf32>
    %c0_23 = arith.constant 0 : index
    %c0_24 = arith.constant 0 : index
    %c0_25 = arith.constant 0 : index
    %37 = vector.load %arg10[%c0_23, %c0_24, %c0_25] : memref<1x1x8xf32, #tpu.memory_space<vmem>>, vector<1x1x8xf32>
    tpu.vector_store %arg10[%c0_23, %c0_24, %c0_25], %36 {strides = array<i32>} : memref<1x1x8xf32, #tpu.memory_space<vmem>>, vector<1x1x8xf32>,
    return
  }
  func.func @transform_0(%arg0: i32) -> (i32, i32) {
    %c0_i32 = arith.constant 0 : i32
    %c0_i32_0 = arith.constant 0 : i32
    return %arg0, %c0_i32 : i32, i32
  }
  func.func @transform_1(%arg0: i32) -> (i32, i32) {
    %c0_i32 = arith.constant 0 : i32
    %c0_i32_0 = arith.constant 0 : i32
    %c0_i32_1 = arith.constant 0 : i32
    return %c0_i32, %c0_i32_0 : i32, i32
  }
  func.func @transform_2(%arg0: i32) -> (i32, i32) {
    %c0_i32 = arith.constant 0 : i32
    %c0_i32_0 = arith.constant 0 : i32
    %c0_i32_1 = arith.constant 0 : i32
    return %c0_i32, %c0_i32_0 : i32, i32
  }
  func.func @transform_3(%arg0: i32) -> (i32, i32) {
    %c0_i32 = arith.constant 0 : i32
    %c0_i32_0 = arith.constant 0 : i32
    %c0_i32_1 = arith.constant 0 : i32
    return %c0_i32, %c0_i32_0 : i32, i32
  }
  func.func @transform_4(%arg0: i32) -> (i32, i32) {
    %c0_i32 = arith.constant 0 : i32
    %c0_i32_0 = arith.constant 0 : i32
    %c0_i32_1 = arith.constant 0 : i32
    return %c0_i32, %c0_i32_0 : i32, i32
  }
  func.func @transform_5(%arg0: i32) -> (i32, i32) {
    %c0_i32 = arith.constant 0 : i32
    %c0_i32_0 = arith.constant 0 : i32
    %c0_i32_1 = arith.constant 0 : i32
    return %c0_i32, %c0_i32_0 : i32, i32
  }
  func.func @transform_6(%arg0: i32) -> (i32, i32) {
    %c0_i32 = arith.constant 0 : i32
    %c0_i32_0 = arith.constant 0 : i32
    %c0_i32_1 = arith.constant 0 : i32
    return %c0_i32, %c0_i32_0 : i32, i32
  }
  func.func @transform_7(%arg0: i32) -> (i32, i32) {
    %c0_i32 = arith.constant 0 : i32
    %c0_i32_0 = arith.constant 0 : i32
    %c0_i32_1 = arith.constant 0 : i32
    return %c0_i32, %c0_i32_0 : i32, i32
  }
  func.func @transform_8(%arg0: i32) -> (i32, i32) {
    %c0_i32 = arith.constant 0 : i32
    %c0_i32_0 = arith.constant 0 : i32
    %c0_i32_1 = arith.constant 0 : i32
    return %c0_i32, %c0_i32_0 : i32, i32
  }
  func.func @transform_9(%arg0: i32) -> (i32, i32, i32) {
    %c0_i32 = arith.constant 0 : i32
    %c0_i32_0 = arith.constant 0 : i32
    %c0_i32_1 = arith.constant 0 : i32
    return %arg0, %c0_i32, %c0_i32_0 : i32, i32, i32
  }
}

</mosaic_0001>

<llo_original>
// kernel: tpu_custom_call.1
$region0: #{tpu_custom_call.1}
  #allocation0 [shape = 'u32[]', space=smem, size = 0x4, offset = 0x4, fixed_abs, tag = 'smem constant byte address 0x4 - core index']
  #allocation1 [shape = 'u32[144,128]{1,0:T(1,128)}', space=vmem, size = 0x12000, scoped, tag = 'internal scratch']
  #allocation2 [shape = 'f32[1,1]{1,0:T(1,128)S(1)}', space=vmem, size = 0x200, scoped, tag = 'scoped memory for tpu_custom_call.1']
  %s0 = inlined_call_operand.hbm [shape: bf16[8,128], index: 0, kind: input, shape index: {}]
  %s1 = inlined_call_operand.hbm [shape: bf16[128,512], index: 1, kind: input, shape index: {}]
  %s2 = inlined_call_operand.vmem [shape: f32[1,512], index: 2, kind: input, shape index: {}]
  %s3 = inlined_call_operand.hbm [shape: bf16[512,256], index: 3, kind: input, shape index: {}]
  %s4 = inlined_call_operand.vmem [shape: f32[1,256], index: 4, kind: input, shape index: {}]
  %s5 = inlined_call_operand.hbm [shape: bf16[256,128], index: 5, kind: input, shape index: {}]
  %s6 = inlined_call_operand.vmem [shape: f32[1,128], index: 6, kind: input, shape index: {}]
  %s7 = inlined_call_operand.vmem [shape: f32[1,128], index: 7, kind: input, shape index: {}]
  %s8 = inlined_call_operand.<no memory space> [shape: f32[1,1], index: 8, kind: input, shape index: {}]
  %s9 = inlined_call_operand.hbm [shape: f32[1,1,8], index: 9, kind: output, shape index: {}]
  %s10 = sld [smem:[#allocation0]]
  $region62: #{tpu_custom_call.1} parent=0
    _
  %s12 = ssub.s32 1, %s10
  %s13 = scalar_select 0, %s12, %s10
  %v14 = vstv %s8
  %15 = vst [vmem:[#allocation2] sm:$0x1] %v14
  $region1: #{tpu_custom_call.1} parent=0
    #allocation3 [shape = 'u8[2048]{0}', space=vmem, size = 0x800, scoped, tag = 'input window, operand 0, single buffered']
    #allocation4 [shape = 's32[1]{0}', space=sflag, size = 0x4, scoped, tag = 'scoped memory for tpu_custom_call.1']
    #allocation5 [shape = 's32[1]{0}', space=sflag, size = 0x4, scoped, tag = 'scoped memory for tpu_custom_call.1']
    #allocation6 [shape = 'u8[131072]{0}', space=vmem, size = 0x20000, scoped, tag = 'input window, operand 1, single buffered']
    #allocation7 [shape = 's32[1]{0}', space=sflag, size = 0x4, scoped, tag = 'scoped memory for tpu_custom_call.1']
    #allocation8 [shape = 'u8[262144]{0}', space=vmem, size = 0x40000, scoped, tag = 'input window, operand 3, single buffered']
    #allocation9 [shape = 'u8[65536]{0}', space=vmem, size = 0x10000, scoped, tag = 'input window, operand 5, single buffered']
    #allocation10 [shape = 's32[1]{0}', space=sflag, size = 0x4, scoped, tag = 'scoped memory for tpu_custom_call.1']
    #allocation11 [shape = 'u8[512]{0}', space=vmem, size = 0x400, scoped, tag = 'output window, operand 0, single buffered']
    %16 = vsyncpa [#allocation4], 0
    %17 = vsyncpa [#allocation7], 0
    %18 = vsyncpa [#allocation10], 0
    %19 = vsyncpa [#allocation5], 0
    // Predicated region
    $region2: #{tpu_custom_call.1} parent=1 // pred_check
      _
    $region3: #{tpu_custom_call.1} parent=1 // pred_check_branch
      %21 = sbr.rel (0) target = $region5
    $region4: #{tpu_custom_call.1} parent=1 // pred_region
      %s23 = ssub.s32 64, 64
      %24 = vsyncadd [#allocation4], %s23
      %s26 = sshll.u32 [#allocation3], 4
      %s27 = int_to_ptr.vmem [resolvable:$true] %s26
      %29 = dma.hbm_to_vmem [thread:$0]  %s0, 64, %s27, [#allocation4]
    $region5: #{tpu_custom_call.1} parent=1 // pred_fallthru
      _
    // Predicated region
    $region6: #{tpu_custom_call.1} parent=1 // pred_check
      _
    $region7: #{tpu_custom_call.1} parent=1 // pred_check_branch
      %31 = sbr.rel (0) target = $region9
    $region8: #{tpu_custom_call.1} parent=1 // pred_region
      %s33 = ssub.s32 4096, 4096
      %34 = vsyncadd [#allocation7], %s33
      %s35 = sshll.u32 [#allocation6], 4
      %s36 = int_to_ptr.vmem [resolvable:$true] %s35
      %41 = dma.hbm_to_vmem [thread:$0]  %s1, 4096, %s36, [#allocation7], 256, 256, 16
    $region9: #{tpu_custom_call.1} parent=1 // pred_fallthru
      _
    // Predicated region
    $region10: #{tpu_custom_call.1} parent=1 // pred_check
      _
    $region11: #{tpu_custom_call.1} parent=1 // pred_check_branch
      %43 = sbr.rel (0) target = $region13
    $region12: #{tpu_custom_call.1} parent=1 // pred_region
      _
    $region13: #{tpu_custom_call.1} parent=1 // pred_fallthru
      _
    // Predicated region
    $region14: #{tpu_custom_call.1} parent=1 // pred_check
      _
    $region15: #{tpu_custom_call.1} parent=1 // pred_check_branch
      %45 = sbr.rel (0) target = $region17
    $region16: #{tpu_custom_call.1} parent=1 // pred_region
      %s47 = ssub.s32 8192, 8192
      %48 = vsyncadd [#allocation7], %s47
      %s49 = sshll.u32 [#allocation8], 4
      %s50 = int_to_ptr.vmem [resolvable:$true] %s49
      %55 = dma.hbm_to_vmem [thread:$0]  %s3, 8192, %s50, [#allocation7], 128, 128, 8
    $region17: #{tpu_custom_call.1} parent=1 // pred_fallthru
      _
    // Predicated region
    $region18: #{tpu_custom_call.1} parent=1 // pred_check
      _
    $region19: #{tpu_custom_call.1} parent=1 // pred_check_branch
      %57 = sbr.rel (0) target = $region21
    $region20: #{tpu_custom_call.1} parent=1 // pred_region
      _
    $region21: #{tpu_custom_call.1} parent=1 // pred_fallthru
      _
    // Predicated region
    $region22: #{tpu_custom_call.1} parent=1 // pred_check
      _
    $region23: #{tpu_custom_call.1} parent=1 // pred_check_branch
      %59 = sbr.rel (0) target = $region25
    $region24: #{tpu_custom_call.1} parent=1 // pred_region
      %s61 = ssub.s32 2048, 2048
      %62 = vsyncadd [#allocation10], %s61
      %s63 = sshll.u32 [#allocation9], 4
      %s64 = int_to_ptr.vmem [resolvable:$true] %s63
      %69 = dma.hbm_to_vmem [thread:$0]  %s5, 2048, %s64, [#allocation10], 64, 64, 4
    $region25: #{tpu_custom_call.1} parent=1 // pred_fallthru
      _
    // Predicated region
    $region26: #{tpu_custom_call.1} parent=1 // pred_check
      _
    $region27: #{tpu_custom_call.1} parent=1 // pred_check_branch
      %71 = sbr.rel (0) target = $region29
    $region28: #{tpu_custom_call.1} parent=1 // pred_region
      _
    $region29: #{tpu_custom_call.1} parent=1 // pred_fallthru
      _
    // Predicated region
    $region30: #{tpu_custom_call.1} parent=1 // pred_check
      _
    $region31: #{tpu_custom_call.1} parent=1 // pred_check_branch
      %73 = sbr.rel (0) target = $region33
    $region32: #{tpu_custom_call.1} parent=1 // pred_region
      _
    $region33: #{tpu_custom_call.1} parent=1 // pred_fallthru
      _
    // Predicated region
    $region34: #{tpu_custom_call.1} parent=1 // pred_check
      _
    $region35: #{tpu_custom_call.1} parent=1 // pred_check_branch
      %75 = sbr.rel (0) target = $region37
    $region36: #{tpu_custom_call.1} parent=1 // pred_region
      _
    $region37: #{tpu_custom_call.1} parent=1 // pred_fallthru
      _
    // Predicated region
    $region38: #{tpu_custom_call.1} parent=1 // pred_check
      _
    $region39: #{tpu_custom_call.1} parent=1 // pred_check_branch
      %77 = sbr.rel (0) target = $region41
    $region40: #{tpu_custom_call.1} parent=1 // pred_region
      %78 = dma.done [#allocation4], 64
    $region41: #{tpu_custom_call.1} parent=1 // pred_fallthru
      _
    // Predicated region
    $region42: #{tpu_custom_call.1} parent=1 // pred_check
      _
    $region43: #{tpu_custom_call.1} parent=1 // pred_check_branch
      %80 = sbr.rel (0) target = $region45
    $region44: #{tpu_custom_call.1} parent=1 // pred_region
      %81 = dma.done [#allocation7], 4096
    $region45: #{tpu_custom_call.1} parent=1 // pred_fallthru
      _
    // Predicated region
    $region46: #{tpu_custom_call.1} parent=1 // pred_check
      _
    $region47: #{tpu_custom_call.1} parent=1 // pred_check_branch
      %83 = sbr.rel (0) target = $region49
    $region48: #{tpu_custom_call.1} parent=1 // pred_region
      %84 = dma.done [#allocation7], 8192
    $region49: #{tpu_custom_call.1} parent=1 // pred_fallthru
      _
    // Predicated region
    $region50: #{tpu_custom_call.1} parent=1 // pred_check
      _
    $region51: #{tpu_custom_call.1} parent=1 // pred_check_branch
      %86 = sbr.rel (0) target = $region53
    $region52: #{tpu_custom_call.1} parent=1 // pred_region
      %87 = dma.done [#allocation10], 2048
    $region53: #{tpu_custom_call.1} parent=1 // pred_fallthru
      _
    %v89 = vld [vmem:[#allocation3] sm:$0xf]
    %v90 = vld [vmem:[#allocation6] sm:$0xff]
    %v91 = vld [vmem:[#allocation6 + $0x8] sm:$0xff]
    %v92 = vld [vmem:[#allocation6 + $0x10] sm:$0xff]
    %v93 = vld [vmem:[#allocation6 + $0x18] sm:$0xff]
    %v94 = vld [vmem:[#allocation6 + $0x20] sm:$0xff]
    %v95 = vld [vmem:[#allocation6 + $0x28] sm:$0xff]
    %v96 = vld [vmem:[#allocation6 + $0x30] sm:$0xff]
    %v97 = vld [vmem:[#allocation6 + $0x38] sm:$0xff]
    %v98 = vld [vmem:[#allocation6 + $0x40] sm:$0xff]
    %v99 = vld [vmem:[#allocation6 + $0x48] sm:$0xff]
    %v100 = vld [vmem:[#allocation6 + $0x50] sm:$0xff]
    %v101 = vld [vmem:[#allocation6 + $0x58] sm:$0xff]
    %v102 = vld [vmem:[#allocation6 + $0x60] sm:$0xff]
    %v103 = vld [vmem:[#allocation6 + $0x68] sm:$0xff]
    %v104 = vld [vmem:[#allocation6 + $0x70] sm:$0xff]
    %v105 = vld [vmem:[#allocation6 + $0x78] sm:$0xff]
    %v106 = vld [vmem:[#allocation6 + $0x80] sm:$0xff]
    %v107 = vld [vmem:[#allocation6 + $0x88] sm:$0xff]
    %v108 = vld [vmem:[#allocation6 + $0x90] sm:$0xff]
    %v109 = vld [vmem:[#allocation6 + $0x98] sm:$0xff]
    %v110 = vld [vmem:[#allocation6 + $0xa0] sm:$0xff]
    %v111 = vld [vmem:[#allocation6 + $0xa8] sm:$0xff]
    %v112 = vld [vmem:[#allocation6 + $0xb0] sm:$0xff]
    %v113 = vld [vmem:[#allocation6 + $0xb8] sm:$0xff]
    %v114 = vld [vmem:[#allocation6 + $0xc0] sm:$0xff]
    %v115 = vld [vmem:[#allocation6 + $0xc8] sm:$0xff]
    %v116 = vld [vmem:[#allocation6 + $0xd0] sm:$0xff]
    %v117 = vld [vmem:[#allocation6 + $0xd8] sm:$0xff]
    %v118 = vld [vmem:[#allocation6 + $0xe0] sm:$0xff]
    %v119 = vld [vmem:[#allocation6 + $0xe8] sm:$0xff]
    %v120 = vld [vmem:[#allocation6 + $0xf0] sm:$0xff]
    %v121 = vld [vmem:[#allocation6 + $0xf8] sm:$0xff]
    %v122 = vld [vmem:[%s2] sm:$0xf]
    %v124 = vlaneseq
    %v125 = vshrl.u32 %v124, 7
    %v126 = vsub.s32 0, %v125
    %v127 = vrot.slane %v122, %v126
    %v128 = vlaneseq
    %v129 = vshrl.u32 %v128, 7
    %v130 = vsub.s32 1, %v129
    %v131 = vrot.slane %v122, %v130
    %v132 = vlaneseq
    %v133 = vshrl.u32 %v132, 7
    %v134 = vsub.s32 2, %v133
    %v135 = vrot.slane %v122, %v134
    %v136 = vlaneseq
    %v137 = vshrl.u32 %v136, 7
    %v138 = vsub.s32 3, %v137
    %v139 = vrot.slane %v122, %v138
    %v176 = vunpack.c.l.b16 %v90
    %v177 = vunpack.c.h.b16 %v90
    %v178 = vunpack.c.l.b16 %v91
    %v179 = vunpack.c.h.b16 %v91
    %v180 = vunpack.c.l.b16 %v92
    %v181 = vunpack.c.h.b16 %v92
    %v182 = vunpack.c.l.b16 %v93
    %v183 = vunpack.c.h.b16 %v93
    %v184 = vunpack.c.l.b16 %v94
    %v185 = vunpack.c.h.b16 %v94
    %v186 = vunpack.c.l.b16 %v95
    %v187 = vunpack.c.h.b16 %v95
    %v188 = vunpack.c.l.b16 %v96
    %v189 = vunpack.c.h.b16 %v96
    %v190 = vunpack.c.l.b16 %v97
    %v191 = vunpack.c.h.b16 %v97
    %v192 = vunpack.c.l.b16 %v98
    %v193 = vunpack.c.h.b16 %v98
    %v194 = vunpack.c.l.b16 %v99
    %v195 = vunpack.c.h.b16 %v99
    %v196 = vunpack.c.l.b16 %v100
    %v197 = vunpack.c.h.b16 %v100
    %v198 = vunpack.c.l.b16 %v101
    %v199 = vunpack.c.h.b16 %v101
    %v200 = vunpack.c.l.b16 %v102
    %v201 = vunpack.c.h.b16 %v102
    %v202 = vunpack.c.l.b16 %v103
    %v203 = vunpack.c.h.b16 %v103
    %v204 = vunpack.c.l.b16 %v104
    %v205 = vunpack.c.h.b16 %v104
    %v206 = vunpack.c.l.b16 %v105
    %v207 = vunpack.c.h.b16 %v105
    %v208 = vunpack.c.l.b16 %v106
    %v209 = vunpack.c.h.b16 %v106
    %v210 = vunpack.c.l.b16 %v107
    %v211 = vunpack.c.h.b16 %v107
    %v212 = vunpack.c.l.b16 %v108
    %v213 = vunpack.c.h.b16 %v108
    %v214 = vunpack.c.l.b16 %v109
    %v215 = vunpack.c.h.b16 %v109
    %v216 = vunpack.c.l.b16 %v110
    %v217 = vunpack.c.h.b16 %v110
    %v218 = vunpack.c.l.b16 %v111
    %v219 = vunpack.c.h.b16 %v111
    %v220 = vunpack.c.l.b16 %v112
    %v221 = vunpack.c.h.b16 %v112
    %v222 = vunpack.c.l.b16 %v113
    %v223 = vunpack.c.h.b16 %v113
    %v224 = vunpack.c.l.b16 %v114
    %v225 = vunpack.c.h.b16 %v114
    %v226 = vunpack.c.l.b16 %v115
    %v227 = vunpack.c.h.b16 %v115
    %v228 = vunpack.c.l.b16 %v116
    %v229 = vunpack.c.h.b16 %v116
    %v230 = vunpack.c.l.b16 %v117
    %v231 = vunpack.c.h.b16 %v117
    %v232 = vunpack.c.l.b16 %v118
    %v233 = vunpack.c.h.b16 %v118
    %v234 = vunpack.c.l.b16 %v119
    %v235 = vunpack.c.h.b16 %v119
    %v236 = vunpack.c.l.b16 %v120
    %v237 = vunpack.c.h.b16 %v120
    %v238 = vunpack.c.l.b16 %v121
    %v239 = vunpack.c.h.b16 %v121
    %v240 = vpack.c.b16 %v180, %v176
    %v241 = vpack.c.b16 %v181, %v177
    %v242 = vpack.c.b16 %v182, %v178
    %v243 = vpack.c.b16 %v183, %v179
    %v244 = vpack.c.b16 %v188, %v184
    %v245 = vpack.c.b16 %v189, %v185
    %v246 = vpack.c.b16 %v190, %v186
    %v247 = vpack.c.b16 %v191, %v187
    %v248 = vpack.c.b16 %v196, %v192
    %v249 = vpack.c.b16 %v197, %v193
    %v250 = vpack.c.b16 %v198, %v194
    %v251 = vpack.c.b16 %v199, %v195
    %v252 = vpack.c.b16 %v204, %v200
    %v253 = vpack.c.b16 %v205, %v201
    %v254 = vpack.c.b16 %v206, %v202
    %v255 = vpack.c.b16 %v207, %v203
    %v256 = vpack.c.b16 %v212, %v208
    %v257 = vpack.c.b16 %v213, %v209
    %v258 = vpack.c.b16 %v214, %v210
    %v259 = vpack.c.b16 %v215, %v211
    %v260 = vpack.c.b16 %v220, %v216
    %v261 = vpack.c.b16 %v221, %v217
    %v262 = vpack.c.b16 %v222, %v218
    %v263 = vpack.c.b16 %v223, %v219
    %v264 = vpack.c.b16 %v228, %v224
    %v265 = vpack.c.b16 %v229, %v225
    %v266 = vpack.c.b16 %v230, %v226
    %v267 = vpack.c.b16 %v231, %v227
    %v268 = vpack.c.b16 %v236, %v232
    %v269 = vpack.c.b16 %v237, %v233
    %v270 = vpack.c.b16 %v238, %v234
    %v271 = vpack.c.b16 %v239, %v235
    %304 = vmatprep.subr.bf16.mxu0 %v241
    %305 = vmatpush1.bf16.msra.mxu0 %v240
    %306 = vmatprep.subr.bf16.mxu0 %v245
    %307 = vmatpush1.bf16.msra.mxu0 %v244
    %308 = vmatprep.subr.bf16.mxu0 %v249
    %309 = vmatpush1.bf16.msra.mxu0 %v248
    %310 = vmatprep.subr.bf16.mxu0 %v253
    %311 = vmatpush1.bf16.msra.mxu0 %v252
    %312 = vmatprep.subr.bf16.mxu0 %v257
    %313 = vmatpush1.bf16.msra.mxu0 %v256
    %314 = vmatprep.subr.bf16.mxu0 %v261
    %315 = vmatpush1.bf16.msra.mxu0 %v260
    %316 = vmatprep.subr.bf16.mxu0 %v265
    %317 = vmatpush1.bf16.msra.mxu0 %v264
    %318 = vmatprep.subr.bf16.mxu0 %v269
    %319 = vmatpush1.bf16.msra.mxu0 %v268
    %320 = vmatprep.subr.bf16.mxu0 0
    %321 = vmatpush1.bf16.msra.mxu0 0
    %322 = vmatprep.subr.bf16.mxu0 0
    %323 = vmatpush1.bf16.msra.mxu0 0
    %324 = vmatprep.subr.bf16.mxu0 0
    %325 = vmatpush1.bf16.msra.mxu0 0
    %326 = vmatprep.subr.bf16.mxu0 0
    %327 = vmatpush1.bf16.msra.mxu0 0
    %328 = vmatprep.subr.bf16.mxu0 0
    %329 = vmatpush1.bf16.msra.mxu0 0
    %330 = vmatprep.subr.bf16.mxu0 0
    %331 = vmatpush1.bf16.msra.mxu0 0
    %332 = vmatprep.subr.bf16.mxu0 0
    %333 = vmatpush1.bf16.msra.mxu0 0
    %334 = vmatprep.subr.bf16.mxu0 0
    %335 = vmatpush1.bf16.msra.mxu0 0
    %336 = vmatprep.mubr.bf16.mxu0 0
    %337 = vmatmul.mubr.bf16.gmra.mrb[0].mxu0 %v89
    %v338 = vpop.f32.mrb[0].mxu0
    %v339 = vadd.f32 %v127, %v338
    %v340 = vpop.f32.mrb[0].mxu0
    %v341 = vadd.f32 %v131, %v340
    %v342 = vpop.f32.mrb[0].mxu0
    %v343 = vpop.f32.mrb[0].mxu0
    %344 = vdwg.mxu0
    %345 = vmatprep.subr.bf16.mxu0 %v243
    %346 = vmatpush1.bf16.msra.mxu0 %v242
    %347 = vmatprep.subr.bf16.mxu0 %v247
    %348 = vmatpush1.bf16.msra.mxu0 %v246
    %349 = vmatprep.subr.bf16.mxu0 %v251
    %350 = vmatpush1.bf16.msra.mxu0 %v250
    %351 = vmatprep.subr.bf16.mxu0 %v255
    %352 = vmatpush1.bf16.msra.mxu0 %v254
    %353 = vmatprep.subr.bf16.mxu0 %v259
    %354 = vmatpush1.bf16.msra.mxu0 %v258
    %355 = vmatprep.subr.bf16.mxu0 %v263
    %356 = vmatpush1.bf16.msra.mxu0 %v262
    %357 = vmatprep.subr.bf16.mxu0 %v267
    %358 = vmatpush1.bf16.msra.mxu0 %v266
    %359 = vmatprep.subr.bf16.mxu0 %v271
    %360 = vmatpush1.bf16.msra.mxu0 %v270
    %361 = vmatprep.subr.bf16.mxu0 0
    %362 = vmatpush1.bf16.msra.mxu0 0
    %363 = vmatprep.subr.bf16.mxu0 0
    %364 = vmatpush1.bf16.msra.mxu0 0
    %365 = vmatprep.subr.bf16.mxu0 0
    %366 = vmatpush1.bf16.msra.mxu0 0
    %367 = vmatprep.subr.bf16.mxu0 0
    %368 = vmatpush1.bf16.msra.mxu0 0
    %369 = vmatprep.subr.bf16.mxu0 0
    %370 = vmatpush1.bf16.msra.mxu0 0
    %371 = vmatprep.subr.bf16.mxu0 0
    %372 = vmatpush1.bf16.msra.mxu0 0
    %373 = vmatprep.subr.bf16.mxu0 0
    %374 = vmatpush1.bf16.msra.mxu0 0
    %375 = vmatprep.subr.bf16.mxu0 0
    %376 = vmatpush1.bf16.msra.mxu0 0
    %377 = vmatprep.mubr.bf16.mxu0 0
    %378 = vmatmul.mubr.bf16.gmra.mrb[0].mxu0 %v89
    %v379 = vpop.f32.mrb[0].mxu0
    %v380 = vadd.f32 %v135, %v379
    %v381 = vpop.f32.mrb[0].mxu0
    %v382 = vadd.f32 %v139, %v381
    %v383 = vpop.f32.mrb[0].mxu0
    %v384 = vpop.f32.mrb[0].mxu0
    %385 = vdwg.mxu0
    %v386 = vmul.f32 %v339, 0.2
    %v387 = vmul.f32 %v341, 0.2
    %v388 = vmul.f32 %v380, 0.2
    %v389 = vmul.f32 %v382, 0.2
    %v390 = vmax.f32 %v339, %v386
    %v391 = vmax.f32 %v341, %v387
    %v392 = vmax.f32 %v380, %v388
    %v393 = vmax.f32 %v382, %v389
    %v394 = vpack.c.bf16 %v390, %v390
    %v395 = vpack.c.bf16 %v391, %v391
    %v396 = vpack.c.bf16 %v392, %v392
    %v397 = vpack.c.bf16 %v393, %v393
    %v398 = vld [vmem:[#allocation8] sm:$0xff]
    %v399 = vld [vmem:[#allocation8 + $0x8] sm:$0xff]
    %v400 = vld [vmem:[#allocation8 + $0x10] sm:$0xff]
    %v401 = vld [vmem:[#allocation8 + $0x18] sm:$0xff]
    %v402 = vld [vmem:[#allocation8 + $0x20] sm:$0xff]
    %v403 = vld [vmem:[#allocation8 + $0x28] sm:$0xff]
    %v404 = vld [vmem:[#allocation8 + $0x30] sm:$0xff]
    %v405 = vld [vmem:[#allocation8 + $0x38] sm:$0xff]
    %v406 = vld [vmem:[#allocation8 + $0x40] sm:$0xff]
    %v407 = vld [vmem:[#allocation8 + $0x48] sm:$0xff]
    %v408 = vld [vmem:[#allocation8 + $0x50] sm:$0xff]
    %v409 = vld [vmem:[#allocation8 + $0x58] sm:$0xff]
    %v410 = vld [vmem:[#allocation8 + $0x60] sm:$0xff]
    %v411 = vld [vmem:[#allocation8 + $0x68] sm:$0xff]
    %v412 = vld [vmem:[#allocation8 + $0x70] sm:$0xff]
    %v413 = vld [vmem:[#allocation8 + $0x78] sm:$0xff]
    %v414 = vld [vmem:[#allocation8 + $0x80] sm:$0xff]
    %v415 = vld [vmem:[#allocation8 + $0x88] sm:$0xff]
    %v416 = vld [vmem:[#allocation8 + $0x90] sm:$0xff]
    %v417 = vld [vmem:[#allocation8 + $0x98] sm:$0xff]
    %v418 = vld [vmem:[#allocation8 + $0xa0] sm:$0xff]
    %v419 = vld [vmem:[#allocation8 + $0xa8] sm:$0xff]
    %v420 = vld [vmem:[#allocation8 + $0xb0] sm:$0xff]
    %v421 = vld [vmem:[#allocation8 + $0xb8] sm:$0xff]
    %v422 = vld [vmem:[#allocation8 + $0xc0] sm:$0xff]
    %v423 = vld [vmem:[#allocation8 + $0xc8] sm:$0xff]
    %v424 = vld [vmem:[#allocation8 + $0xd0] sm:$0xff]
    %v425 = vld [vmem:[#allocation8 + $0xd8] sm:$0xff]
    %v426 = vld [vmem:[#allocation8 + $0xe0] sm:$0xff]
    %v427 = vld [vmem:[#allocation8 + $0xe8] sm:$0xff]
    %v428 = vld [vmem:[#allocation8 + $0xf0] sm:$0xff]
    %v429 = vld [vmem:[#allocation8 + $0xf8] sm:$0xff]
    %v430 = vld [vmem:[#allocation8 + $0x100] sm:$0xff]
    %v431 = vld [vmem:[#allocation8 + $0x108] sm:$0xff]
    %v432 = vld [vmem:[#allocation8 + $0x110] sm:$0xff]
    %v433 = vld [vmem:[#allocation8 + $0x118] sm:$0xff]
    %v434 = vld [vmem:[#allocation8 + $0x120] sm:$0xff]
    %v435 = vld [vmem:[#allocation8 + $0x128] sm:$0xff]
    %v436 = vld [vmem:[#allocation8 + $0x130] sm:$0xff]
    %v437 = vld [vmem:[#allocation8 + $0x138] sm:$0xff]
    %v438 = vld [vmem:[#allocation8 + $0x140] sm:$0xff]
    %v439 = vld [vmem:[#allocation8 + $0x148] sm:$0xff]
    %v440 = vld [vmem:[#allocation8 + $0x150] sm:$0xff]
    %v441 = vld [vmem:[#allocation8 + $0x158] sm:$0xff]
    %v442 = vld [vmem:[#allocation8 + $0x160] sm:$0xff]
    %v443 = vld [vmem:[#allocation8 + $0x168] sm:$0xff]
    %v444 = vld [vmem:[#allocation8 + $0x170] sm:$0xff]
    %v445 = vld [vmem:[#allocation8 + $0x178] sm:$0xff]
    %v446 = vld [vmem:[#allocation8 + $0x180] sm:$0xff]
    %v447 = vld [vmem:[#allocation8 + $0x188] sm:$0xff]
    %v448 = vld [vmem:[#allocation8 + $0x190] sm:$0xff]
    %v449 = vld [vmem:[#allocation8 + $0x198] sm:$0xff]
    %v450 = vld [vmem:[#allocation8 + $0x1a0] sm:$0xff]
    %v451 = vld [vmem:[#allocation8 + $0x1a8] sm:$0xff]
    %v452 = vld [vmem:[#allocation8 + $0x1b0] sm:$0xff]
    %v453 = vld [vmem:[#allocation8 + $0x1b8] sm:$0xff]
    %v454 = vld [vmem:[#allocation8 + $0x1c0] sm:$0xff]
    %v455 = vld [vmem:[#allocation8 + $0x1c8] sm:$0xff]
    %v456 = vld [vmem:[#allocation8 + $0x1d0] sm:$0xff]
    %v457 = vld [vmem:[#allocation8 + $0x1d8] sm:$0xff]
    %v458 = vld [vmem:[#allocation8 + $0x1e0] sm:$0xff]
    %v459 = vld [vmem:[#allocation8 + $0x1e8] sm:$0xff]
    %v460 = vld [vmem:[#allocation8 + $0x1f0] sm:$0xff]
    %v461 = vld [vmem:[#allocation8 + $0x1f8] sm:$0xff]
    %v462 = vld [vmem:[%s4] sm:$0x3]
    %v464 = vlaneseq
    %v465 = vshrl.u32 %v464, 7
    %v466 = vsub.s32 0, %v465
    %v467 = vrot.slane %v462, %v466
    %v468 = vlaneseq
    %v469 = vshrl.u32 %v468, 7
    %v470 = vsub.s32 1, %v469
    %v471 = vrot.slane %v462, %v470
    %v538 = vunpack.c.l.b16 %v398
    %v539 = vunpack.c.h.b16 %v398
    %v540 = vunpack.c.l.b16 %v399
    %v541 = vunpack.c.h.b16 %v399
    %v542 = vunpack.c.l.b16 %v400
    %v543 = vunpack.c.h.b16 %v400
    %v544 = vunpack.c.l.b16 %v401
    %v545 = vunpack.c.h.b16 %v401
    %v546 = vunpack.c.l.b16 %v402
    %v547 = vunpack.c.h.b16 %v402
    %v548 = vunpack.c.l.b16 %v403
    %v549 = vunpack.c.h.b16 %v403
    %v550 = vunpack.c.l.b16 %v404
    %v551 = vunpack.c.h.b16 %v404
    %v552 = vunpack.c.l.b16 %v405
    %v553 = vunpack.c.h.b16 %v405
    %v554 = vunpack.c.l.b16 %v406
    %v555 = vunpack.c.h.b16 %v406
    %v556 = vunpack.c.l.b16 %v407
    %v557 = vunpack.c.h.b16 %v407
    %v558 = vunpack.c.l.b16 %v408
    %v559 = vunpack.c.h.b16 %v408
    %v560 = vunpack.c.l.b16 %v409
    %v561 = vunpack.c.h.b16 %v409
    %v562 = vunpack.c.l.b16 %v410
    %v563 = vunpack.c.h.b16 %v410
    %v564 = vunpack.c.l.b16 %v411
    %v565 = vunpack.c.h.b16 %v411
    %v566 = vunpack.c.l.b16 %v412
    %v567 = vunpack.c.h.b16 %v412
    %v568 = vunpack.c.l.b16 %v413
    %v569 = vunpack.c.h.b16 %v413
    %v570 = vunpack.c.l.b16 %v414
    %v571 = vunpack.c.h.b16 %v414
    %v572 = vunpack.c.l.b16 %v415
    %v573 = vunpack.c.h.b16 %v415
    %v574 = vunpack.c.l.b16 %v416
    %v575 = vunpack.c.h.b16 %v416
    %v576 = vunpack.c.l.b16 %v417
    %v577 = vunpack.c.h.b16 %v417
    %v578 = vunpack.c.l.b16 %v418
    %v579 = vunpack.c.h.b16 %v418
    %v580 = vunpack.c.l.b16 %v419
    %v581 = vunpack.c.h.b16 %v419
    %v582 = vunpack.c.l.b16 %v420
    %v583 = vunpack.c.h.b16 %v420
    %v584 = vunpack.c.l.b16 %v421
    %v585 = vunpack.c.h.b16 %v421
    %v586 = vunpack.c.l.b16 %v422
    %v587 = vunpack.c.h.b16 %v422
    %v588 = vunpack.c.l.b16 %v423
    %v589 = vunpack.c.h.b16 %v423
    %v590 = vunpack.c.l.b16 %v424
    %v591 = vunpack.c.h.b16 %v424
    %v592 = vunpack.c.l.b16 %v425
    %v593 = vunpack.c.h.b16 %v425
    %v594 = vunpack.c.l.b16 %v426
    %v595 = vunpack.c.h.b16 %v426
    %v596 = vunpack.c.l.b16 %v427
    %v597 = vunpack.c.h.b16 %v427
    %v598 = vunpack.c.l.b16 %v428
    %v599 = vunpack.c.h.b16 %v428
    %v600 = vunpack.c.l.b16 %v429
    %v601 = vunpack.c.h.b16 %v429
    %v602 = vunpack.c.l.b16 %v430
    %v603 = vunpack.c.h.b16 %v430
    %v604 = vunpack.c.l.b16 %v431
    %v605 = vunpack.c.h.b16 %v431
    %v606 = vunpack.c.l.b16 %v432
    %v607 = vunpack.c.h.b16 %v432
    %v608 = vunpack.c.l.b16 %v433
    %v609 = vunpack.c.h.b16 %v433
    %v610 = vunpack.c.l.b16 %v434
    %v611 = vunpack.c.h.b16 %v434
    %v612 = vunpack.c.l.b16 %v435
    %v613 = vunpack.c.h.b16 %v435
    %v614 = vunpack.c.l.b16 %v436
    %v615 = vunpack.c.h.b16 %v436
    %v616 = vunpack.c.l.b16 %v437
    %v617 = vunpack.c.h.b16 %v437
    %v618 = vunpack.c.l.b16 %v438
    %v619 = vunpack.c.h.b16 %v438
    %v620 = vunpack.c.l.b16 %v439
    %v621 = vunpack.c.h.b16 %v439
    %v622 = vunpack.c.l.b16 %v440
    %v623 = vunpack.c.h.b16 %v440
    %v624 = vunpack.c.l.b16 %v441
    %v625 = vunpack.c.h.b16 %v441
    %v626 = vunpack.c.l.b16 %v442
    %v627 = vunpack.c.h.b16 %v442
    %v628 = vunpack.c.l.b16 %v443
    %v629 = vunpack.c.h.b16 %v443
    %v630 = vunpack.c.l.b16 %v444
    %v631 = vunpack.c.h.b16 %v444
    %v632 = vunpack.c.l.b16 %v445
    %v633 = vunpack.c.h.b16 %v445
    %v634 = vunpack.c.l.b16 %v446
    %v635 = vunpack.c.h.b16 %v446
    %v636 = vunpack.c.l.b16 %v447
    %v637 = vunpack.c.h.b16 %v447
    %v638 = vunpack.c.l.b16 %v448
    %v639 = vunpack.c.h.b16 %v448
    %v640 = vunpack.c.l.b16 %v449
    %v641 = vunpack.c.h.b16 %v449
    %v642 = vunpack.c.l.b16 %v450
    %v643 = vunpack.c.h.b16 %v450
    %v644 = vunpack.c.l.b16 %v451
    %v645 = vunpack.c.h.b16 %v451
    %v646 = vunpack.c.l.b16 %v452
    %v647 = vunpack.c.h.b16 %v452
    %v648 = vunpack.c.l.b16 %v453
    %v649 = vunpack.c.h.b16 %v453
    %v650 = vunpack.c.l.b16 %v454
    %v651 = vunpack.c.h.b16 %v454
    %v652 = vunpack.c.l.b16 %v455
    %v653 = vunpack.c.h.b16 %v455
    %v654 = vunpack.c.l.b16 %v456
    %v655 = vunpack.c.h.b16 %v456
    %v656 = vunpack.c.l.b16 %v457
    %v657 = vunpack.c.h.b16 %v457
    %v658 = vunpack.c.l.b16 %v458
    %v659 = vunpack.c.h.b16 %v458
    %v660 = vunpack.c.l.b16 %v459
    %v661 = vunpack.c.h.b16 %v459
    %v662 = vunpack.c.l.b16 %v460
    %v663 = vunpack.c.h.b16 %v460
    %v664 = vunpack.c.l.b16 %v461
    %v665 = vunpack.c.h.b16 %v461
    %v666 = vpack.c.b16 %v540, %v538
    %v667 = vpack.c.b16 %v541, %v539
    %v668 = vpack.c.b16 %v544, %v542
    %v669 = vpack.c.b16 %v545, %v543
    %v670 = vpack.c.b16 %v548, %v546
    %v671 = vpack.c.b16 %v549, %v547
    %v672 = vpack.c.b16 %v552, %v550
    %v673 = vpack.c.b16 %v553, %v551
    %v674 = vpack.c.b16 %v556, %v554
    %v675 = vpack.c.b16 %v557, %v555
    %v676 = vpack.c.b16 %v560, %v558
    %v677 = vpack.c.b16 %v561, %v559
    %v678 = vpack.c.b16 %v564, %v562
    %v679 = vpack.c.b16 %v565, %v563
    %v680 = vpack.c.b16 %v568, %v566
    %v681 = vpack.c.b16 %v569, %v567
    %v682 = vpack.c.b16 %v572, %v570
    %v683 = vpack.c.b16 %v573, %v571
    %v684 = vpack.c.b16 %v576, %v574
    %v685 = vpack.c.b16 %v577, %v575
    %v686 = vpack.c.b16 %v580, %v578
    %v687 = vpack.c.b16 %v581, %v579
    %v688 = vpack.c.b16 %v584, %v582
    %v689 = vpack.c.b16 %v585, %v583
    %v690 = vpack.c.b16 %v588, %v586
    %v691 = vpack.c.b16 %v589, %v587
    %v692 = vpack.c.b16 %v592, %v590
    %v693 = vpack.c.b16 %v593, %v591
    %v694 = vpack.c.b16 %v596, %v594
    %v695 = vpack.c.b16 %v597, %v595
    %v696 = vpack.c.b16 %v600, %v598
    %v697 = vpack.c.b16 %v601, %v599
    %v698 = vpack.c.b16 %v604, %v602
    %v699 = vpack.c.b16 %v605, %v603
    %v700 = vpack.c.b16 %v608, %v606
    %v701 = vpack.c.b16 %v609, %v607
    %v702 = vpack.c.b16 %v612, %v610
    %v703 = vpack.c.b16 %v613, %v611
    %v704 = vpack.c.b16 %v616, %v614
    %v705 = vpack.c.b16 %v617, %v615
    %v706 = vpack.c.b16 %v620, %v618
    %v707 = vpack.c.b16 %v621, %v619
    %v708 = vpack.c.b16 %v624, %v622
    %v709 = vpack.c.b16 %v625, %v623
    %v710 = vpack.c.b16 %v628, %v626
    %v711 = vpack.c.b16 %v629, %v627
    %v712 = vpack.c.b16 %v632, %v630
    %v713 = vpack.c.b16 %v633, %v631
    %v714 = vpack.c.b16 %v636, %v634
    %v715 = vpack.c.b16 %v637, %v635
    %v716 = vpack.c.b16 %v640, %v638
    %v717 = vpack.c.b16 %v641, %v639
    %v718 = vpack.c.b16 %v644, %v642
    %v719 = vpack.c.b16 %v645, %v643
    %v720 = vpack.c.b16 %v648, %v646
    %v721 = vpack.c.b16 %v649, %v647
    %v722 = vpack.c.b16 %v652, %v650
    %v723 = vpack.c.b16 %v653, %v651
    %v724 = vpack.c.b16 %v656, %v654
    %v725 = vpack.c.b16 %v657, %v655
    %v726 = vpack.c.b16 %v660, %v658
    %v727 = vpack.c.b16 %v661, %v659
    %v728 = vpack.c.b16 %v664, %v662
    %v729 = vpack.c.b16 %v665, %v663
    %794 = vmatprep.subr.bf16.mxu0 %v667
    %795 = vmatpush1.bf16.msra.mxu0 %v666
    %796 = vmatprep.subr.bf16.mxu0 %v669
    %797 = vmatpush1.bf16.msra.mxu0 %v668
    %798 = vmatprep.subr.bf16.mxu0 %v671
    %799 = vmatpush1.bf16.msra.mxu0 %v670
    %800 = vmatprep.subr.bf16.mxu0 %v673
    %801 = vmatpush1.bf16.msra.mxu0 %v672
    %802 = vmatprep.subr.bf16.mxu0 %v675
    %803 = vmatpush1.bf16.msra.mxu0 %v674
    %804 = vmatprep.subr.bf16.mxu0 %v677
    %805 = vmatpush1.bf16.msra.mxu0 %v676
    %806 = vmatprep.subr.bf16.mxu0 %v679
    %807 = vmatpush1.bf16.msra.mxu0 %v678
    %808 = vmatprep.subr.bf16.mxu0 %v681
    %809 = vmatpush1.bf16.msra.mxu0 %v680
    %810 = vmatprep.subr.bf16.mxu0 %v683
    %811 = vmatpush1.bf16.msra.mxu0 %v682
    %812 = vmatprep.subr.bf16.mxu0 %v685
    %813 = vmatpush1.bf16.msra.mxu0 %v684
    %814 = vmatprep.subr.bf16.mxu0 %v687
    %815 = vmatpush1.bf16.msra.mxu0 %v686
    %816 = vmatprep.subr.bf16.mxu0 %v689
    %817 = vmatpush1.bf16.msra.mxu0 %v688
    %818 = vmatprep.subr.bf16.mxu0 %v691
    %819 = vmatpush1.bf16.msra.mxu0 %v690
    %820 = vmatprep.subr.bf16.mxu0 %v693
    %821 = vmatpush1.bf16.msra.mxu0 %v692
    %822 = vmatprep.subr.bf16.mxu0 %v695
    %823 = vmatpush1.bf16.msra.mxu0 %v694
    %824 = vmatprep.subr.bf16.mxu0 %v697
    %825 = vmatpush1.bf16.msra.mxu0 %v696
    %826 = vmatprep.mubr.bf16.mxu0 %v395
    %827 = vmatmul.mubr.bf16.gmra.mrb[0].mxu0 %v394
    %v828 = vpop.f32.mrb[0].mxu0
    %v829 = vadd.f32 %v467, %v828
    %v830 = vpop.f32.mrb[0].mxu0
    %v831 = vadd.f32 %v471, %v830
    %v832 = vpop.f32.mrb[0].mxu0
    %v833 = vpop.f32.mrb[0].mxu0
    %834 = vdwg.mxu0
    %835 = vmatprep.subr.bf16.mxu0 %v699
    %836 = vmatpush1.bf16.msra.mxu0 %v698
    %837 = vmatprep.subr.bf16.mxu0 %v701
    %838 = vmatpush1.bf16.msra.mxu0 %v700
    %839 = vmatprep.subr.bf16.mxu0 %v703
    %840 = vmatpush1.bf16.msra.mxu0 %v702
    %841 = vmatprep.subr.bf16.mxu0 %v705
    %842 = vmatpush1.bf16.msra.mxu0 %v704
    %843 = vmatprep.subr.bf16.mxu0 %v707
    %844 = vmatpush1.bf16.msra.mxu0 %v706
    %845 = vmatprep.subr.bf16.mxu0 %v709
    %846 = vmatpush1.bf16.msra.mxu0 %v708
    %847 = vmatprep.subr.bf16.mxu0 %v711
    %848 = vmatpush1.bf16.msra.mxu0 %v710
    %849 = vmatprep.subr.bf16.mxu0 %v713
    %850 = vmatpush1.bf16.msra.mxu0 %v712
    %851 = vmatprep.subr.bf16.mxu0 %v715
    %852 = vmatpush1.bf16.msra.mxu0 %v714
    %853 = vmatprep.subr.bf16.mxu0 %v717
    %854 = vmatpush1.bf16.msra.mxu0 %v716
    %855 = vmatprep.subr.bf16.mxu0 %v719
    %856 = vmatpush1.bf16.msra.mxu0 %v718
    %857 = vmatprep.subr.bf16.mxu0 %v721
    %858 = vmatpush1.bf16.msra.mxu0 %v720
    %859 = vmatprep.subr.bf16.mxu0 %v723
    %860 = vmatpush1.bf16.msra.mxu0 %v722
    %861 = vmatprep.subr.bf16.mxu0 %v725
    %862 = vmatpush1.bf16.msra.mxu0 %v724
    %863 = vmatprep.subr.bf16.mxu0 %v727
    %864 = vmatpush1.bf16.msra.mxu0 %v726
    %865 = vmatprep.subr.bf16.mxu0 %v729
    %866 = vmatpush1.bf16.msra.mxu0 %v728
    %867 = vmatprep.mubr.bf16.mxu0 %v397
    %868 = vmatmul.mubr.bf16.gmra.mrb[0].mxu0 %v396
    %v869 = vpop.f32.mrb[0].mxu0
    %v870 = vadd.f32 %v829, %v869
    %v871 = vpop.f32.mrb[0].mxu0
    %v872 = vadd.f32 %v831, %v871
    %v873 = vpop.f32.mrb[0].mxu0
    %v874 = vpop.f32.mrb[0].mxu0
    %875 = vdwg.mxu0
    %v876 = vmul.f32 %v870, 0.2
    %v877 = vmul.f32 %v872, 0.2
    %v878 = vmax.f32 %v870, %v876
    %v879 = vmax.f32 %v872, %v877
    %v880 = vpack.c.bf16 %v878, %v878
    %v881 = vpack.c.bf16 %v879, %v879
    %v882 = vld [vmem:[#allocation9] sm:$0xf]
    %v883 = vld [vmem:[#allocation9 + $0x4] sm:$0xf]
    %v884 = vld [vmem:[#allocation9 + $0x8] sm:$0xf]
    %v885 = vld [vmem:[#allocation9 + $0xc] sm:$0xf]
    %v886 = vld [vmem:[#allocation9 + $0x10] sm:$0xf]
    %v887 = vld [vmem:[#allocation9 + $0x14] sm:$0xf]
    %v888 = vld [vmem:[#allocation9 + $0x18] sm:$0xf]
    %v889 = vld [vmem:[#allocation9 + $0x1c] sm:$0xf]
    %v890 = vld [vmem:[#allocation9 + $0x20] sm:$0xf]
    %v891 = vld [vmem:[#allocation9 + $0x24] sm:$0xf]
    %v892 = vld [vmem:[#allocation9 + $0x28] sm:$0xf]
    %v893 = vld [vmem:[#allocation9 + $0x2c] sm:$0xf]
    %v894 = vld [vmem:[#allocation9 + $0x30] sm:$0xf]
    %v895 = vld [vmem:[#allocation9 + $0x34] sm:$0xf]
    %v896 = vld [vmem:[#allocation9 + $0x38] sm:$0xf]
    %v897 = vld [vmem:[#allocation9 + $0x3c] sm:$0xf]
    %v898 = vld [vmem:[#allocation9 + $0x40] sm:$0xf]
    %v899 = vld [vmem:[#allocation9 + $0x44] sm:$0xf]
    %v900 = vld [vmem:[#allocation9 + $0x48] sm:$0xf]
    %v901 = vld [vmem:[#allocation9 + $0x4c] sm:$0xf]
    %v902 = vld [vmem:[#allocation9 + $0x50] sm:$0xf]
    %v903 = vld [vmem:[#allocation9 + $0x54] sm:$0xf]
    %v904 = vld [vmem:[#allocation9 + $0x58] sm:$0xf]
    %v905 = vld [vmem:[#allocation9 + $0x5c] sm:$0xf]
    %v906 = vld [vmem:[#allocation9 + $0x60] sm:$0xf]
    %v907 = vld [vmem:[#allocation9 + $0x64] sm:$0xf]
    %v908 = vld [vmem:[#allocation9 + $0x68] sm:$0xf]
    %v909 = vld [vmem:[#allocation9 + $0x6c] sm:$0xf]
    %v910 = vld [vmem:[#allocation9 + $0x70] sm:$0xf]
    %v911 = vld [vmem:[#allocation9 + $0x74] sm:$0xf]
    %v912 = vld [vmem:[#allocation9 + $0x78] sm:$0xf]
    %v913 = vld [vmem:[#allocation9 + $0x7c] sm:$0xf]
    %v914 = vld [vmem:[%s6] sm:$0x1]
    %v916 = vlaneseq
    %v917 = vshrl.u32 %v916, 7
    %v918 = vsub.s32 0, %v917
    %v919 = vrot.slane %v914, %v918
    %v953 = vunpack.c.l.b16 %v882
    %v954 = vunpack.c.l.b16 %v883
    %v955 = vunpack.c.l.b16 %v884
    %v956 = vunpack.c.l.b16 %v885
    %v957 = vunpack.c.l.b16 %v886
    %v958 = vunpack.c.l.b16 %v887
    %v959 = vunpack.c.l.b16 %v888
    %v960 = vunpack.c.l.b16 %v889
    %v961 = vunpack.c.l.b16 %v890
    %v962 = vunpack.c.l.b16 %v891
    %v963 = vunpack.c.l.b16 %v892
    %v964 = vunpack.c.l.b16 %v893
    %v965 = vunpack.c.l.b16 %v894
    %v966 = vunpack.c.l.b16 %v895
    %v967 = vunpack.c.l.b16 %v896
    %v968 = vunpack.c.l.b16 %v897
    %v969 = vunpack.c.l.b16 %v898
    %v970 = vunpack.c.l.b16 %v899
    %v971 = vunpack.c.l.b16 %v900
    %v972 = vunpack.c.l.b16 %v901
    %v973 = vunpack.c.l.b16 %v902
    %v974 = vunpack.c.l.b16 %v903
    %v975 = vunpack.c.l.b16 %v904
    %v976 = vunpack.c.l.b16 %v905
    %v977 = vunpack.c.l.b16 %v906
    %v978 = vunpack.c.l.b16 %v907
    %v979 = vunpack.c.l.b16 %v908
    %v980 = vunpack.c.l.b16 %v909
    %v981 = vunpack.c.l.b16 %v910
    %v982 = vunpack.c.l.b16 %v911
    %v983 = vunpack.c.l.b16 %v912
    %v984 = vunpack.c.l.b16 %v913
    %v985 = vpack.c.b16 %v954, %v953
    %v986 = vpack.c.b16 %v956, %v955
    %v987 = vpack.c.b16 %v958, %v957
    %v988 = vpack.c.b16 %v960, %v959
    %v989 = vpack.c.b16 %v962, %v961
    %v990 = vpack.c.b16 %v964, %v963
    %v991 = vpack.c.b16 %v966, %v965
    %v992 = vpack.c.b16 %v968, %v967
    %v993 = vpack.c.b16 %v970, %v969
    %v994 = vpack.c.b16 %v972, %v971
    %v995 = vpack.c.b16 %v974, %v973
    %v996 = vpack.c.b16 %v976, %v975
    %v997 = vpack.c.b16 %v978, %v977
    %v998 = vpack.c.b16 %v980, %v979
    %v999 = vpack.c.b16 %v982, %v981
    %v1000 = vpack.c.b16 %v984, %v983
    %1017 = vmatprep.subr.bf16.mxu0 0
    %1018 = vmatpush1.bf16.msra.mxu0 %v985
    %1019 = vmatprep.subr.bf16.mxu0 0
    %1020 = vmatpush1.bf16.msra.mxu0 %v986
    %1021 = vmatprep.subr.bf16.mxu0 0
    %1022 = vmatpush1.bf16.msra.mxu0 %v987
    %1023 = vmatprep.subr.bf16.mxu0 0
    %1024 = vmatpush1.bf16.msra.mxu0 %v988
    %1025 = vmatprep.subr.bf16.mxu0 0
    %1026 = vmatpush1.bf16.msra.mxu0 %v989
    %1027 = vmatprep.subr.bf16.mxu0 0
    %1028 = vmatpush1.bf16.msra.mxu0 %v990
    %1029 = vmatprep.subr.bf16.mxu0 0
    %1030 = vmatpush1.bf16.msra.mxu0 %v991
    %1031 = vmatprep.subr.bf16.mxu0 0
    %1032 = vmatpush1.bf16.msra.mxu0 %v992
    %1033 = vmatprep.subr.bf16.mxu0 0
    %1034 = vmatpush1.bf16.msra.mxu0 %v993
    %1035 = vmatprep.subr.bf16.mxu0 0
    %1036 = vmatpush1.bf16.msra.mxu0 %v994
    %1037 = vmatprep.subr.bf16.mxu0 0
    %1038 = vmatpush1.bf16.msra.mxu0 %v995
    %1039 = vmatprep.subr.bf16.mxu0 0
    %1040 = vmatpush1.bf16.msra.mxu0 %v996
    %1041 = vmatprep.subr.bf16.mxu0 0
    %1042 = vmatpush1.bf16.msra.mxu0 %v997
    %1043 = vmatprep.subr.bf16.mxu0 0
    %1044 = vmatpush1.bf16.msra.mxu0 %v998
    %1045 = vmatprep.subr.bf16.mxu0 0
    %1046 = vmatpush1.bf16.msra.mxu0 %v999
    %1047 = vmatprep.subr.bf16.mxu0 0
    %1048 = vmatpush1.bf16.msra.mxu0 %v1000
    %1049 = vmatprep.mubr.bf16.mxu0 %v881
    %1050 = vmatmul.mubr.bf16.gmra.mrb[0].mxu0 %v880
    %v1051 = vpop.f32.mrb[0].mxu0
    %v1052 = vadd.f32 %v919, %v1051
    %v1053 = vpop.f32.mrb[0].mxu0
    %v1054 = vpop.f32.mrb[0].mxu0
    %v1055 = vpop.f32.mrb[0].mxu0
    %1056 = vdwg.mxu0
    %v1057 = vmul.f32 %v1052, 0.2
    %v1058 = vmax.f32 %v1052, %v1057
    %v1059 = vld [vmem:[%s7] sm:$0x1]
    %v1061 = vlaneseq
    %v1062 = vshrl.u32 %v1061, 7
    %v1063 = vsub.s32 0, %v1062
    %v1064 = vrot.slane %v1059, %v1063
    %v1066 = vmul.f32 %v1058, %v1064
    %1067 = vadd.xlane.f32.xlu0 %v1066
    %v1068 = vpop.xlane.xlu0 %1067
    %1069 = vxpose.xlu0.b32.start [1/16] %v1068, 128
    %1070 = vxpose.xlu0.b32.cont [2/16] 0.0, 128
    %1071 = vxpose.xlu0.b32.cont [3/16] 0.0, 128
    %1072 = vxpose.xlu0.b32.cont [4/16] 0.0, 128
    %1073 = vxpose.xlu0.b32.cont [5/16] 0.0, 128
    %1074 = vxpose.xlu0.b32.cont [6/16] 0.0, 128
    %1075 = vxpose.xlu0.b32.cont [7/16] 0.0, 128
    %1076 = vxpose.xlu0.b32.cont [8/16] 0.0, 128
    %1077 = vxpose.xlu0.b32.cont [9/16] 0.0, 128
    %1078 = vxpose.xlu0.b32.cont [10/16] 0.0, 128
    %1079 = vxpose.xlu0.b32.cont [11/16] 0.0, 128
    %1080 = vxpose.xlu0.b32.cont [12/16] 0.0, 128
    %1081 = vxpose.xlu0.b32.cont [13/16] 0.0, 128
    %1082 = vxpose.xlu0.b32.cont [14/16] 0.0, 128
    %1083 = vxpose.xlu0.b32.cont [15/16] 0.0, 128
    %1084 = vxpose.xlu0.b32.end [16/16] 0.0, 128
    %v1085 = vpop.trf.xlu0
    %v1086 = vpop.trf.xlu0
    %v1087 = vpop.trf.xlu0
    %v1088 = vpop.trf.xlu0
    %v1089 = vpop.trf.xlu0
    %v1090 = vpop.trf.xlu0
    %v1091 = vpop.trf.xlu0
    %v1092 = vpop.trf.xlu0
    %v1093 = vpop.trf.xlu0
    %v1094 = vpop.trf.xlu0
    %v1095 = vpop.trf.xlu0
    %v1096 = vpop.trf.xlu0
    %v1097 = vpop.trf.xlu0
    %v1098 = vpop.trf.xlu0
    %v1099 = vpop.trf.xlu0
    %v1100 = vpop.trf.xlu0
    %v1101 = vld [vmem:[#allocation2] sm:$0x1]
    %1103 = vset.pattern.permute.xlu0 0
    %1104 = vperm.xlu0 %1103, %v1101
    %v1105 = vpop.permute.xlu0 %1104
    %v1107 = vlaneseq
    %v1108 = vshrl.u32 %v1107, 7
    %v1109 = vsub.s32 0, %v1108
    %v1110 = vrot.slane %v1105, %v1109
    %v1111 = vadd.f32 %v1085, %v1110
    %vm1112 = vcmask 57344
    %1113 = vst.msk [vmem:[#allocation11] sm:$0x1] %vm1112, %v1111
    // Predicated region
    $region54: #{tpu_custom_call.1} parent=1 // pred_check
      _
    $region55: #{tpu_custom_call.1} parent=1 // pred_check_branch
      %1115 = sbr.rel (0) target = $region57
    $region56: #{tpu_custom_call.1} parent=1 // pred_region
      %s1117 = ssub.s32 16, 16
      %1118 = vsyncadd [#allocation5], %s1117
      %s1120 = sshll.u32 [#allocation11], 4
      %s1121 = int_to_ptr.vmem [resolvable:$true] %s1120
      %1123 = dma.vmem_to_hbm [thread:$0]  %s1121, 16, %s9, [#allocation5]
    $region57: #{tpu_custom_call.1} parent=1 // pred_fallthru
      _
    // Predicated region
    $region58: #{tpu_custom_call.1} parent=1 // pred_check
      _
    $region59: #{tpu_custom_call.1} parent=1 // pred_check_branch
      %1125 = sbr.rel (0) target = $region61
    $region60: #{tpu_custom_call.1} parent=1 // pred_region
      %1126 = dma.done [#allocation5], 16
    $region61: #{tpu_custom_call.1} parent=1 // pred_fallthru
      _
    %1127 = vsyncpa [#allocation4], 1
    %1128 = vsyncpa [#allocation7], 1
    %1129 = vsyncpa [#allocation10], 1
    %1130 = vsyncpa [#allocation5], 1

// kernel: tpu_custom_call.1
$region0: #{tpu_custom_call.1}
  #allocation0 [shape = 'u32[]', space=smem, size = 0x4, offset = 0x4, fixed_abs, tag = 'smem constant byte address 0x4 - core index']
  #allocation1 [shape = 'u32[144,128]{1,0:T(1,128)}', space=vmem, size = 0x12000, scoped, tag = 'internal scratch']
  #allocation2 [shape = 'f32[1,1]{1,0:T(1,128)S(1)}', space=vmem, size = 0x200, scoped, tag = 'scoped memory for tpu_custom_call.1']
  %s0 = inlined_call_operand.hbm [shape: bf16[8,128], index: 0, kind: input, shape index: {}]
  %s1 = inlined_call_operand.hbm [shape: bf16[128,512], index: 1, kind: input, shape index: {}]
  %s2 = inlined_call_operand.vmem [shape: f32[1,512], index: 2, kind: input, shape index: {}]
  %s3 = inlined_call_operand.hbm [shape: bf16[512,256], index: 3, kind: input, shape index: {}]
  %s4 = inlined_call_operand.vmem [shape: f32[1,256], index: 4, kind: input, shape index: {}]
  %s5 = inlined_call_operand.hbm [shape: bf16[256,128], index: 5, kind: input, shape index: {}]
  %s6 = inlined_call_operand.vmem [shape: f32[1,128], index: 6, kind: input, shape index: {}]
  %s7 = inlined_call_operand.vmem [shape: f32[1,128], index: 7, kind: input, shape index: {}]
  %s8 = inlined_call_operand.<no memory space> [shape: f32[1,1], index: 8, kind: input, shape index: {}]
  %s9 = inlined_call_operand.hbm [shape: f32[1,1,8], index: 9, kind: output, shape index: {}]
  %s10 = sld [smem:[#allocation0]]
  $region62: #{tpu_custom_call.1} parent=0
    _
  %s12 = ssub.s32 1, %s10
  %s13 = scalar_select 0, %s12, %s10
  %v14 = vstv %s8
  %15 = vst [vmem:[#allocation2] sm:$0x1] %v14
  $region1: #{tpu_custom_call.1} parent=0
    #allocation3 [shape = 'u8[2048]{0}', space=vmem, size = 0x800, scoped, tag = 'input window, operand 0, single buffered']
    #allocation4 [shape = 's32[1]{0}', space=sflag, size = 0x4, scoped, tag = 'scoped memory for tpu_custom_call.1']
    #allocation5 [shape = 's32[1]{0}', space=sflag, size = 0x4, scoped, tag = 'scoped memory for tpu_custom_call.1']
    #allocation6 [shape = 'u8[131072]{0}', space=vmem, size = 0x20000, scoped, tag = 'input window, operand 1, single buffered']
    #allocation7 [shape = 's32[1]{0}', space=sflag, size = 0x4, scoped, tag = 'scoped memory for tpu_custom_call.1']
    #allocation8 [shape = 'u8[262144]{0}', space=vmem, size = 0x40000, scoped, tag = 'input window, operand 3, single buffered']
    #allocation9 [shape = 'u8[65536]{0}', space=vmem, size = 0x10000, scoped, tag = 'input window, operand 5, single buffered']
    #allocation10 [shape = 's32[1]{0}', space=sflag, size = 0x4, scoped, tag = 'scoped memory for tpu_custom_call.1']
    #allocation11 [shape = 'u8[512]{0}', space=vmem, size = 0x400, scoped, tag = 'output window, operand 0, single buffered']
    %16 = vsyncpa [#allocation4], 0
    %17 = vsyncpa [#allocation7], 0
    %18 = vsyncpa [#allocation10], 0
    %19 = vsyncpa [#allocation5], 0
    // Predicated region
    $region2: #{tpu_custom_call.1} parent=1 // pred_check
      _
    $region3: #{tpu_custom_call.1} parent=1 // pred_check_branch
      %21 = sbr.rel (0) target = $region5
    $region4: #{tpu_custom_call.1} parent=1 // pred_region
      %s23 = ssub.s32 64, 64
      %24 = vsyncadd [#allocation4], %s23
      %s26 = sshll.u32 [#allocation3], 4
      %s27 = int_to_ptr.vmem [resolvable:$true] %s26
      %29 = dma.hbm_to_vmem [thread:$0]  %s0, 64, %s27, [#allocation4]
    $region5: #{tpu_custom_call.1} parent=1 // pred_fallthru
      _
    // Predicated region
    $region6: #{tpu_custom_call.1} parent=1 // pred_check
      _
    $region7: #{tpu_custom_call.1} parent=1 // pred_check_branch
      %31 = sbr.rel (0) target = $region9
    $region8: #{tpu_custom_call.1} parent=1 // pred_region
      %s33 = ssub.s32 4096, 4096
      %34 = vsyncadd [#allocation7], %s33
      %s35 = sshll.u32 [#allocation6], 4
      %s36 = int_to_ptr.vmem [resolvable:$true] %s35
      %41 = dma.hbm_to_vmem [thread:$0]  %s1, 4096, %s36, [#allocation7], 256, 256, 16
    $region9: #{tpu_custom_call.1} parent=1 // pred_fallthru
      _
    // Predicated region
    $region10: #{tpu_custom_call.1} parent=1 // pred_check
      _
    $region11: #{tpu_custom_call.1} parent=1 // pred_check_branch
      %43 = sbr.rel (0) target = $region13
    $region12: #{tpu_custom_call.1} parent=1 // pred_region
      _
    $region13: #{tpu_custom_call.1} parent=1 // pred_fallthru
      _
    // Predicated region
    $region14: #{tpu_custom_call.1} parent=1 // pred_check
      _
    $region15: #{tpu_custom_call.1} parent=1 // pred_check_branch
      %45 = sbr.rel (0) target = $region17
    $region16: #{tpu_custom_call.1} parent=1 // pred_region
      %s47 = ssub.s32 8192, 8192
      %48 = vsyncadd [#allocation7], %s47
      %s49 = sshll.u32 [#allocation8], 4
      %s50 = int_to_ptr.vmem [resolvable:$true] %s49
      %55 = dma.hbm_to_vmem [thread:$0]  %s3, 8192, %s50, [#allocation7], 128, 128, 8
    $region17: #{tpu_custom_call.1} parent=1 // pred_fallthru
      _
    // Predicated region
    $region18: #{tpu_custom_call.1} parent=1 // pred_check
      _
    $region19: #{tpu_custom_call.1} parent=1 // pred_check_branch
      %57 = sbr.rel (0) target = $region21
    $region20: #{tpu_custom_call.1} parent=1 // pred_region
      _
    $region21: #{tpu_custom_call.1} parent=1 // pred_fallthru
      _
    // Predicated region
    $region22: #{tpu_custom_call.1} parent=1 // pred_check
      _
    $region23: #{tpu_custom_call.1} parent=1 // pred_check_branch
      %59 = sbr.rel (0) target = $region25
    $region24: #{tpu_custom_call.1} parent=1 // pred_region
      %s61 = ssub.s32 2048, 2048
      %62 = vsyncadd [#allocation10], %s61
      %s63 = sshll.u32 [#allocation9], 4
      %s64 = int_to_ptr.vmem [resolvable:$true] %s63
      %69 = dma.hbm_to_vmem [thread:$0]  %s5, 2048, %s64, [#allocation10], 64, 64, 4
    $region25: #{tpu_custom_call.1} parent=1 // pred_fallthru
      _
    // Predicated region
    $region26: #{tpu_custom_call.1} parent=1 // pred_check
      _
    $region27: #{tpu_custom_call.1} parent=1 // pred_check_branch
      %71 = sbr.rel (0) target = $region29
    $region28: #{tpu_custom_call.1} parent=1 // pred_region
      _
    $region29: #{tpu_custom_call.1} parent=1 // pred_fallthru
      _
    // Predicated region
    $region30: #{tpu_custom_call.1} parent=1 // pred_check
      _
    $region31: #{tpu_custom_call.1} parent=1 // pred_check_branch
      %73 = sbr.rel (0) target = $region33
    $region32: #{tpu_custom_call.1} parent=1 // pred_region
      _
    $region33: #{tpu_custom_call.1} parent=1 // pred_fallthru
      _
    // Predicated region
    $region34: #{tpu_custom_call.1} parent=1 // pred_check
      _
    $region35: #{tpu_custom_call.1} parent=1 // pred_check_branch
      %75 = sbr.rel (0) target = $region37
    $region36: #{tpu_custom_call.1} parent=1 // pred_region
      _
    $region37: #{tpu_custom_call.1} parent=1 // pred_fallthru
      _
    // Predicated region
    $region38: #{tpu_custom_call.1} parent=1 // pred_check
      _
    $region39: #{tpu_custom_call.1} parent=1 // pred_check_branch
      %77 = sbr.rel (0) target = $region41
    $region40: #{tpu_custom_call.1} parent=1 // pred_region
      %78 = dma.done [#allocation4], 64
    $region41: #{tpu_custom_call.1} parent=1 // pred_fallthru
      _
    // Predicated region
    $region42: #{tpu_custom_call.1} parent=1 // pred_check
      _
    $region43: #{tpu_custom_call.1} parent=1 // pred_check_branch
      %80 = sbr.rel (0) target = $region45
    $region44: #{tpu_custom_call.1} parent=1 // pred_region
      %81 = dma.done [#allocation7], 4096
    $region45: #{tpu_custom_call.1} parent=1 // pred_fallthru
      _
    // Predicated region
    $region46: #{tpu_custom_call.1} parent=1 // pred_check
      _
    $region47: #{tpu_custom_call.1} parent=1 // pred_check_branch
      %83 = sbr.rel (0) target = $region49
    $region48: #{tpu_custom_call.1} parent=1 // pred_region
      %84 = dma.done [#allocation7], 8192
    $region49: #{tpu_custom_call.1} parent=1 // pred_fallthru
      _
    // Predicated region
    $region50: #{tpu_custom_call.1} parent=1 // pred_check
      _
    $region51: #{tpu_custom_call.1} parent=1 // pred_check_branch
      %86 = sbr.rel (0) target = $region53
    $region52: #{tpu_custom_call.1} parent=1 // pred_region
      %87 = dma.done [#allocation10], 2048
    $region53: #{tpu_custom_call.1} parent=1 // pred_fallthru
      _
    %v89 = vld [vmem:[#allocation3] sm:$0xf]
    %v90 = vld [vmem:[#allocation6] sm:$0xff]
    %v91 = vld [vmem:[#allocation6 + $0x8] sm:$0xff]
    %v92 = vld [vmem:[#allocation6 + $0x10] sm:$0xff]
    %v93 = vld [vmem:[#allocation6 + $0x18] sm:$0xff]
    %v94 = vld [vmem:[#allocation6 + $0x20] sm:$0xff]
    %v95 = vld [vmem:[#allocation6 + $0x28] sm:$0xff]
    %v96 = vld [vmem:[#allocation6 + $0x30] sm:$0xff]
    %v97 = vld [vmem:[#allocation6 + $0x38] sm:$0xff]
    %v98 = vld [vmem:[#allocation6 + $0x40] sm:$0xff]
    %v99 = vld [vmem:[#allocation6 + $0x48] sm:$0xff]
    %v100 = vld [vmem:[#allocation6 + $0x50] sm:$0xff]
    %v101 = vld [vmem:[#allocation6 + $0x58] sm:$0xff]
    %v102 = vld [vmem:[#allocation6 + $0x60] sm:$0xff]
    %v103 = vld [vmem:[#allocation6 + $0x68] sm:$0xff]
    %v104 = vld [vmem:[#allocation6 + $0x70] sm:$0xff]
    %v105 = vld [vmem:[#allocation6 + $0x78] sm:$0xff]
    %v106 = vld [vmem:[#allocation6 + $0x80] sm:$0xff]
    %v107 = vld [vmem:[#allocation6 + $0x88] sm:$0xff]
    %v108 = vld [vmem:[#allocation6 + $0x90] sm:$0xff]
    %v109 = vld [vmem:[#allocation6 + $0x98] sm:$0xff]
    %v110 = vld [vmem:[#allocation6 + $0xa0] sm:$0xff]
    %v111 = vld [vmem:[#allocation6 + $0xa8] sm:$0xff]
    %v112 = vld [vmem:[#allocation6 + $0xb0] sm:$0xff]
    %v113 = vld [vmem:[#allocation6 + $0xb8] sm:$0xff]
    %v114 = vld [vmem:[#allocation6 + $0xc0] sm:$0xff]
    %v115 = vld [vmem:[#allocation6 + $0xc8] sm:$0xff]
    %v116 = vld [vmem:[#allocation6 + $0xd0] sm:$0xff]
    %v117 = vld [vmem:[#allocation6 + $0xd8] sm:$0xff]
    %v118 = vld [vmem:[#allocation6 + $0xe0] sm:$0xff]
    %v119 = vld [vmem:[#allocation6 + $0xe8] sm:$0xff]
    %v120 = vld [vmem:[#allocation6 + $0xf0] sm:$0xff]
    %v121 = vld [vmem:[#allocation6 + $0xf8] sm:$0xff]
    %v122 = vld [vmem:[%s2] sm:$0xf]
    %v124 = vlaneseq
    %v125 = vshrl.u32 %v124, 7
    %v126 = vsub.s32 0, %v125
    %v127 = vrot.slane %v122, %v126
    %v128 = vlaneseq
    %v129 = vshrl.u32 %v128, 7
    %v130 = vsub.s32 1, %v129
    %v131 = vrot.slane %v122, %v130
    %v132 = vlaneseq
    %v133 = vshrl.u32 %v132, 7
    %v134 = vsub.s32 2, %v133
    %v135 = vrot.slane %v122, %v134
    %v136 = vlaneseq
    %v137 = vshrl.u32 %v136, 7
    %v138 = vsub.s32 3, %v137
    %v139 = vrot.slane %v122, %v138
    %v176 = vunpack.c.l.b16 %v90
    %v177 = vunpack.c.h.b16 %v90
    %v178 = vunpack.c.l.b16 %v91
    %v179 = vunpack.c.h.b16 %v91
    %v180 = vunpack.c.l.b16 %v92
    %v181 = vunpack.c.h.b16 %v92
    %v182 = vunpack.c.l.b16 %v93
    %v183 = vunpack.c.h.b16 %v93
    %v184 = vunpack.c.l.b16 %v94
    %v185 = vunpack.c.h.b16 %v94
    %v186 = vunpack.c.l.b16 %v95
    %v187 = vunpack.c.h.b16 %v95
    %v188 = vunpack.c.l.b16 %v96
    %v189 = vunpack.c.h.b16 %v96
    %v190 = vunpack.c.l.b16 %v97
    %v191 = vunpack.c.h.b16 %v97
    %v192 = vunpack.c.l.b16 %v98
    %v193 = vunpack.c.h.b16 %v98
    %v194 = vunpack.c.l.b16 %v99
    %v195 = vunpack.c.h.b16 %v99
    %v196 = vunpack.c.l.b16 %v100
    %v197 = vunpack.c.h.b16 %v100
    %v198 = vunpack.c.l.b16 %v101
    %v199 = vunpack.c.h.b16 %v101
    %v200 = vunpack.c.l.b16 %v102
    %v201 = vunpack.c.h.b16 %v102
    %v202 = vunpack.c.l.b16 %v103
    %v203 = vunpack.c.h.b16 %v103
    %v204 = vunpack.c.l.b16 %v104
    %v205 = vunpack.c.h.b16 %v104
    %v206 = vunpack.c.l.b16 %v105
    %v207 = vunpack.c.h.b16 %v105
    %v208 = vunpack.c.l.b16 %v106
    %v209 = vunpack.c.h.b16 %v106
    %v210 = vunpack.c.l.b16 %v107
    %v211 = vunpack.c.h.b16 %v107
    %v212 = vunpack.c.l.b16 %v108
    %v213 = vunpack.c.h.b16 %v108
    %v214 = vunpack.c.l.b16 %v109
    %v215 = vunpack.c.h.b16 %v109
    %v216 = vunpack.c.l.b16 %v110
    %v217 = vunpack.c.h.b16 %v110
    %v218 = vunpack.c.l.b16 %v111
    %v219 = vunpack.c.h.b16 %v111
    %v220 = vunpack.c.l.b16 %v112
    %v221 = vunpack.c.h.b16 %v112
    %v222 = vunpack.c.l.b16 %v113
    %v223 = vunpack.c.h.b16 %v113
    %v224 = vunpack.c.l.b16 %v114
    %v225 = vunpack.c.h.b16 %v114
    %v226 = vunpack.c.l.b16 %v115
    %v227 = vunpack.c.h.b16 %v115
    %v228 = vunpack.c.l.b16 %v116
    %v229 = vunpack.c.h.b16 %v116
    %v230 = vunpack.c.l.b16 %v117
    %v231 = vunpack.c.h.b16 %v117
    %v232 = vunpack.c.l.b16 %v118
    %v233 = vunpack.c.h.b16 %v118
    %v234 = vunpack.c.l.b16 %v119
    %v235 = vunpack.c.h.b16 %v119
    %v236 = vunpack.c.l.b16 %v120
    %v237 = vunpack.c.h.b16 %v120
    %v238 = vunpack.c.l.b16 %v121
    %v239 = vunpack.c.h.b16 %v121
    %v240 = vpack.c.b16 %v180, %v176
    %v241 = vpack.c.b16 %v181, %v177
    %v242 = vpack.c.b16 %v182, %v178
    %v243 = vpack.c.b16 %v183, %v179
    %v244 = vpack.c.b16 %v188, %v184
    %v245 = vpack.c.b16 %v189, %v185
    %v246 = vpack.c.b16 %v190, %v186
    %v247 = vpack.c.b16 %v191, %v187
    %v248 = vpack.c.b16 %v196, %v192
    %v249 = vpack.c.b16 %v197, %v193
    %v250 = vpack.c.b16 %v198, %v194
    %v251 = vpack.c.b16 %v199, %v195
    %v252 = vpack.c.b16 %v204, %v200
    %v253 = vpack.c.b16 %v205, %v201
    %v254 = vpack.c.b16 %v206, %v202
    %v255 = vpack.c.b16 %v207, %v203
    %v256 = vpack.c.b16 %v212, %v208
    %v257 = vpack.c.b16 %v213, %v209
    %v258 = vpack.c.b16 %v214, %v210
    %v259 = vpack.c.b16 %v215, %v211
    %v260 = vpack.c.b16 %v220, %v216
    %v261 = vpack.c.b16 %v221, %v217
    %v262 = vpack.c.b16 %v222, %v218
    %v263 = vpack.c.b16 %v223, %v219
    %v264 = vpack.c.b16 %v228, %v224
    %v265 = vpack.c.b16 %v229, %v225
    %v266 = vpack.c.b16 %v230, %v226
    %v267 = vpack.c.b16 %v231, %v227
    %v268 = vpack.c.b16 %v236, %v232
    %v269 = vpack.c.b16 %v237, %v233
    %v270 = vpack.c.b16 %v238, %v234
    %v271 = vpack.c.b16 %v239, %v235
    %304 = vmatprep.subr.bf16.mxu0 %v241
    %305 = vmatpush1.bf16.msra.mxu0 %v240
    %306 = vmatprep.subr.bf16.mxu0 %v245
    %307 = vmatpush1.bf16.msra.mxu0 %v244
    %308 = vmatprep.subr.bf16.mxu0 %v249
    %309 = vmatpush1.bf16.msra.mxu0 %v248
    %310 = vmatprep.subr.bf16.mxu0 %v253
    %311 = vmatpush1.bf16.msra.mxu0 %v252
    %312 = vmatprep.subr.bf16.mxu0 %v257
    %313 = vmatpush1.bf16.msra.mxu0 %v256
    %314 = vmatprep.subr.bf16.mxu0 %v261
    %315 = vmatpush1.bf16.msra.mxu0 %v260
    %316 = vmatprep.subr.bf16.mxu0 %v265
    %317 = vmatpush1.bf16.msra.mxu0 %v264
    %318 = vmatprep.subr.bf16.mxu0 %v269
    %319 = vmatpush1.bf16.msra.mxu0 %v268
    %320 = vmatprep.subr.bf16.mxu0 0
    %321 = vmatpush1.bf16.msra.mxu0 0
    %322 = vmatprep.subr.bf16.mxu0 0
    %323 = vmatpush1.bf16.msra.mxu0 0
    %324 = vmatprep.subr.bf16.mxu0 0
    %325 = vmatpush1.bf16.msra.mxu0 0
    %326 = vmatprep.subr.bf16.mxu0 0
    %327 = vmatpush1.bf16.msra.mxu0 0
    %328 = vmatprep.subr.bf16.mxu0 0
    %329 = vmatpush1.bf16.msra.mxu0 0
    %330 = vmatprep.subr.bf16.mxu0 0
    %331 = vmatpush1.bf16.msra.mxu0 0
    %332 = vmatprep.subr.bf16.mxu0 0
    %333 = vmatpush1.bf16.msra.mxu0 0
    %334 = vmatprep.subr.bf16.mxu0 0
    %335 = vmatpush1.bf16.msra.mxu0 0
    %336 = vmatprep.mubr.bf16.mxu0 0
    %337 = vmatmul.mubr.bf16.gmra.mrb[0].mxu0 %v89
    %v338 = vpop.f32.mrb[0].mxu0
    %v339 = vadd.f32 %v127, %v338
    %v340 = vpop.f32.mrb[0].mxu0
    %v341 = vadd.f32 %v131, %v340
    %v342 = vpop.f32.mrb[0].mxu0
    %v343 = vpop.f32.mrb[0].mxu0
    %344 = vdwg.mxu0
    %345 = vmatprep.subr.bf16.mxu0 %v243
    %346 = vmatpush1.bf16.msra.mxu0 %v242
    %347 = vmatprep.subr.bf16.mxu0 %v247
    %348 = vmatpush1.bf16.msra.mxu0 %v246
    %349 = vmatprep.subr.bf16.mxu0 %v251
    %350 = vmatpush1.bf16.msra.mxu0 %v250
    %351 = vmatprep.subr.bf16.mxu0 %v255
    %352 = vmatpush1.bf16.msra.mxu0 %v254
    %353 = vmatprep.subr.bf16.mxu0 %v259
    %354 = vmatpush1.bf16.msra.mxu0 %v258
    %355 = vmatprep.subr.bf16.mxu0 %v263
    %356 = vmatpush1.bf16.msra.mxu0 %v262
    %357 = vmatprep.subr.bf16.mxu0 %v267
    %358 = vmatpush1.bf16.msra.mxu0 %v266
    %359 = vmatprep.subr.bf16.mxu0 %v271
    %360 = vmatpush1.bf16.msra.mxu0 %v270
    %361 = vmatprep.subr.bf16.mxu0 0
    %362 = vmatpush1.bf16.msra.mxu0 0
    %363 = vmatprep.subr.bf16.mxu0 0
    %364 = vmatpush1.bf16.msra.mxu0 0
    %365 = vmatprep.subr.bf16.mxu0 0
    %366 = vmatpush1.bf16.msra.mxu0 0
    %367 = vmatprep.subr.bf16.mxu0 0
    %368 = vmatpush1.bf16.msra.mxu0 0
    %369 = vmatprep.subr.bf16.mxu0 0
    %370 = vmatpush1.bf16.msra.mxu0 0
    %371 = vmatprep.subr.bf16.mxu0 0
    %372 = vmatpush1.bf16.msra.mxu0 0
    %373 = vmatprep.subr.bf16.mxu0 0
    %374 = vmatpush1.bf16.msra.mxu0 0
    %375 = vmatprep.subr.bf16.mxu0 0
    %376 = vmatpush1.bf16.msra.mxu0 0
    %377 = vmatprep.mubr.bf16.mxu0 0
    %378 = vmatmul.mubr.bf16.gmra.mrb[0].mxu0 %v89
    %v379 = vpop.f32.mrb[0].mxu0
    %v380 = vadd.f32 %v135, %v379
    %v381 = vpop.f32.mrb[0].mxu0
    %v382 = vadd.f32 %v139, %v381
    %v383 = vpop.f32.mrb[0].mxu0
    %v384 = vpop.f32.mrb[0].mxu0
    %385 = vdwg.mxu0
    %v386 = vmul.f32 %v339, 0.2
    %v387 = vmul.f32 %v341, 0.2
    %v388 = vmul.f32 %v380, 0.2
    %v389 = vmul.f32 %v382, 0.2
    %v390 = vmax.f32 %v339, %v386
    %v391 = vmax.f32 %v341, %v387
    %v392 = vmax.f32 %v380, %v388
    %v393 = vmax.f32 %v382, %v389
    %v394 = vpack.c.bf16 %v390, %v390
    %v395 = vpack.c.bf16 %v391, %v391
    %v396 = vpack.c.bf16 %v392, %v392
    %v397 = vpack.c.bf16 %v393, %v393
    %v398 = vld [vmem:[#allocation8] sm:$0xff]
    %v399 = vld [vmem:[#allocation8 + $0x8] sm:$0xff]
    %v400 = vld [vmem:[#allocation8 + $0x10] sm:$0xff]
    %v401 = vld [vmem:[#allocation8 + $0x18] sm:$0xff]
    %v402 = vld [vmem:[#allocation8 + $0x20] sm:$0xff]
    %v403 = vld [vmem:[#allocation8 + $0x28] sm:$0xff]
    %v404 = vld [vmem:[#allocation8 + $0x30] sm:$0xff]
    %v405 = vld [vmem:[#allocation8 + $0x38] sm:$0xff]
    %v406 = vld [vmem:[#allocation8 + $0x40] sm:$0xff]
    %v407 = vld [vmem:[#allocation8 + $0x48] sm:$0xff]
    %v408 = vld [vmem:[#allocation8 + $0x50] sm:$0xff]
    %v409 = vld [vmem:[#allocation8 + $0x58] sm:$0xff]
    %v410 = vld [vmem:[#allocation8 + $0x60] sm:$0xff]
    %v411 = vld [vmem:[#allocation8 + $0x68] sm:$0xff]
    %v412 = vld [vmem:[#allocation8 + $0x70] sm:$0xff]
    %v413 = vld [vmem:[#allocation8 + $0x78] sm:$0xff]
    %v414 = vld [vmem:[#allocation8 + $0x80] sm:$0xff]
    %v415 = vld [vmem:[#allocation8 + $0x88] sm:$0xff]
    %v416 = vld [vmem:[#allocation8 + $0x90] sm:$0xff]
    %v417 = vld [vmem:[#allocation8 + $0x98] sm:$0xff]
    %v418 = vld [vmem:[#allocation8 + $0xa0] sm:$0xff]
    %v419 = vld [vmem:[#allocation8 + $0xa8] sm:$0xff]
    %v420 = vld [vmem:[#allocation8 + $0xb0] sm:$0xff]
    %v421 = vld [vmem:[#allocation8 + $0xb8] sm:$0xff]
    %v422 = vld [vmem:[#allocation8 + $0xc0] sm:$0xff]
    %v423 = vld [vmem:[#allocation8 + $0xc8] sm:$0xff]
    %v424 = vld [vmem:[#allocation8 + $0xd0] sm:$0xff]
    %v425 = vld [vmem:[#allocation8 + $0xd8] sm:$0xff]
    %v426 = vld [vmem:[#allocation8 + $0xe0] sm:$0xff]
    %v427 = vld [vmem:[#allocation8 + $0xe8] sm:$0xff]
    %v428 = vld [vmem:[#allocation8 + $0xf0] sm:$0xff]
    %v429 = vld [vmem:[#allocation8 + $0xf8] sm:$0xff]
    %v430 = vld [vmem:[#allocation8 + $0x100] sm:$0xff]
    %v431 = vld [vmem:[#allocation8 + $0x108] sm:$0xff]
    %v432 = vld [vmem:[#allocation8 + $0x110] sm:$0xff]
    %v433 = vld [vmem:[#allocation8 + $0x118] sm:$0xff]
    %v434 = vld [vmem:[#allocation8 + $0x120] sm:$0xff]
    %v435 = vld [vmem:[#allocation8 + $0x128] sm:$0xff]
    %v436 = vld [vmem:[#allocation8 + $0x130] sm:$0xff]
    %v437 = vld [vmem:[#allocation8 + $0x138] sm:$0xff]
    %v438 = vld [vmem:[#allocation8 + $0x140] sm:$0xff]
    %v439 = vld [vmem:[#allocation8 + $0x148] sm:$0xff]
    %v440 = vld [vmem:[#allocation8 + $0x150] sm:$0xff]
    %v441 = vld [vmem:[#allocation8 + $0x158] sm:$0xff]
    %v442 = vld [vmem:[#allocation8 + $0x160] sm:$0xff]
    %v443 = vld [vmem:[#allocation8 + $0x168] sm:$0xff]
    %v444 = vld [vmem:[#allocation8 + $0x170] sm:$0xff]
    %v445 = vld [vmem:[#allocation8 + $0x178] sm:$0xff]
    %v446 = vld [vmem:[#allocation8 + $0x180] sm:$0xff]
    %v447 = vld [vmem:[#allocation8 + $0x188] sm:$0xff]
    %v448 = vld [vmem:[#allocation8 + $0x190] sm:$0xff]
    %v449 = vld [vmem:[#allocation8 + $0x198] sm:$0xff]
    %v450 = vld [vmem:[#allocation8 + $0x1a0] sm:$0xff]
    %v451 = vld [vmem:[#allocation8 + $0x1a8] sm:$0xff]
    %v452 = vld [vmem:[#allocation8 + $0x1b0] sm:$0xff]
    %v453 = vld [vmem:[#allocation8 + $0x1b8] sm:$0xff]
    %v454 = vld [vmem:[#allocation8 + $0x1c0] sm:$0xff]
    %v455 = vld [vmem:[#allocation8 + $0x1c8] sm:$0xff]
    %v456 = vld [vmem:[#allocation8 + $0x1d0] sm:$0xff]
    %v457 = vld [vmem:[#allocation8 + $0x1d8] sm:$0xff]
    %v458 = vld [vmem:[#allocation8 + $0x1e0] sm:$0xff]
    %v459 = vld [vmem:[#allocation8 + $0x1e8] sm:$0xff]
    %v460 = vld [vmem:[#allocation8 + $0x1f0] sm:$0xff]
    %v461 = vld [vmem:[#allocation8 + $0x1f8] sm:$0xff]
    %v462 = vld [vmem:[%s4] sm:$0x3]
    %v464 = vlaneseq
    %v465 = vshrl.u32 %v464, 7
    %v466 = vsub.s32 0, %v465
    %v467 = vrot.slane %v462, %v466
    %v468 = vlaneseq
    %v469 = vshrl.u32 %v468, 7
    %v470 = vsub.s32 1, %v469
    %v471 = vrot.slane %v462, %v470
    %v538 = vunpack.c.l.b16 %v398
    %v539 = vunpack.c.h.b16 %v398
    %v540 = vunpack.c.l.b16 %v399
    %v541 = vunpack.c.h.b16 %v399
    %v542 = vunpack.c.l.b16 %v400
    %v543 = vunpack.c.h.b16 %v400
    %v544 = vunpack.c.l.b16 %v401
    %v545 = vunpack.c.h.b16 %v401
    %v546 = vunpack.c.l.b16 %v402
    %v547 = vunpack.c.h.b16 %v402
    %v548 = vunpack.c.l.b16 %v403
    %v549 = vunpack.c.h.b16 %v403
    %v550 = vunpack.c.l.b16 %v404
    %v551 = vunpack.c.h.b16 %v404
    %v552 = vunpack.c.l.b16 %v405
    %v553 = vunpack.c.h.b16 %v405
    %v554 = vunpack.c.l.b16 %v406
    %v555 = vunpack.c.h.b16 %v406
    %v556 = vunpack.c.l.b16 %v407
    %v557 = vunpack.c.h.b16 %v407
    %v558 = vunpack.c.l.b16 %v408
    %v559 = vunpack.c.h.b16 %v408
    %v560 = vunpack.c.l.b16 %v409
    %v561 = vunpack.c.h.b16 %v409
    %v562 = vunpack.c.l.b16 %v410
    %v563 = vunpack.c.h.b16 %v410
    %v564 = vunpack.c.l.b16 %v411
    %v565 = vunpack.c.h.b16 %v411
    %v566 = vunpack.c.l.b16 %v412
    %v567 = vunpack.c.h.b16 %v412
    %v568 = vunpack.c.l.b16 %v413
    %v569 = vunpack.c.h.b16 %v413
    %v570 = vunpack.c.l.b16 %v414
    %v571 = vunpack.c.h.b16 %v414
    %v572 = vunpack.c.l.b16 %v415
    %v573 = vunpack.c.h.b16 %v415
    %v574 = vunpack.c.l.b16 %v416
    %v575 = vunpack.c.h.b16 %v416
    %v576 = vunpack.c.l.b16 %v417
    %v577 = vunpack.c.h.b16 %v417
    %v578 = vunpack.c.l.b16 %v418
    %v579 = vunpack.c.h.b16 %v418
    %v580 = vunpack.c.l.b16 %v419
    %v581 = vunpack.c.h.b16 %v419
    %v582 = vunpack.c.l.b16 %v420
    %v583 = vunpack.c.h.b16 %v420
    %v584 = vunpack.c.l.b16 %v421
    %v585 = vunpack.c.h.b16 %v421
    %v586 = vunpack.c.l.b16 %v422
    %v587 = vunpack.c.h.b16 %v422
    %v588 = vunpack.c.l.b16 %v423
    %v589 = vunpack.c.h.b16 %v423
    %v590 = vunpack.c.l.b16 %v424
    %v591 = vunpack.c.h.b16 %v424
    %v592 = vunpack.c.l.b16 %v425
    %v593 = vunpack.c.h.b16 %v425
    %v594 = vunpack.c.l.b16 %v426
    %v595 = vunpack.c.h.b16 %v426
    %v596 = vunpack.c.l.b16 %v427
    %v597 = vunpack.c.h.b16 %v427
    %v598 = vunpack.c.l.b16 %v428
    %v599 = vunpack.c.h.b16 %v428
    %v600 = vunpack.c.l.b16 %v429
    %v601 = vunpack.c.h.b16 %v429
    %v602 = vunpack.c.l.b16 %v430
    %v603 = vunpack.c.h.b16 %v430
    %v604 = vunpack.c.l.b16 %v431
    %v605 = vunpack.c.h.b16 %v431
    %v606 = vunpack.c.l.b16 %v432
    %v607 = vunpack.c.h.b16 %v432
    %v608 = vunpack.c.l.b16 %v433
    %v609 = vunpack.c.h.b16 %v433
    %v610 = vunpack.c.l.b16 %v434
    %v611 = vunpack.c.h.b16 %v434
    %v612 = vunpack.c.l.b16 %v435
    %v613 = vunpack.c.h.b16 %v435
    %v614 = vunpack.c.l.b16 %v436
    %v615 = vunpack.c.h.b16 %v436
    %v616 = vunpack.c.l.b16 %v437
    %v617 = vunpack.c.h.b16 %v437
    %v618 = vunpack.c.l.b16 %v438
    %v619 = vunpack.c.h.b16 %v438
    %v620 = vunpack.c.l.b16 %v439
    %v621 = vunpack.c.h.b16 %v439
    %v622 = vunpack.c.l.b16 %v440
    %v623 = vunpack.c.h.b16 %v440
    %v624 = vunpack.c.l.b16 %v441
    %v625 = vunpack.c.h.b16 %v441
    %v626 = vunpack.c.l.b16 %v442
    %v627 = vunpack.c.h.b16 %v442
    %v628 = vunpack.c.l.b16 %v443
    %v629 = vunpack.c.h.b16 %v443
    %v630 = vunpack.c.l.b16 %v444
    %v631 = vunpack.c.h.b16 %v444
    %v632 = vunpack.c.l.b16 %v445
    %v633 = vunpack.c.h.b16 %v445
    %v634 = vunpack.c.l.b16 %v446
    %v635 = vunpack.c.h.b16 %v446
    %v636 = vunpack.c.l.b16 %v447
    %v637 = vunpack.c.h.b16 %v447
    %v638 = vunpack.c.l.b16 %v448
    %v639 = vunpack.c.h.b16 %v448
    %v640 = vunpack.c.l.b16 %v449
    %v641 = vunpack.c.h.b16 %v449
    %v642 = vunpack.c.l.b16 %v450
    %v643 = vunpack.c.h.b16 %v450
    %v644 = vunpack.c.l.b16 %v451
    %v645 = vunpack.c.h.b16 %v451
    %v646 = vunpack.c.l.b16 %v452
    %v647 = vunpack.c.h.b16 %v452
    %v648 = vunpack.c.l.b16 %v453
    %v649 = vunpack.c.h.b16 %v453
    %v650 = vunpack.c.l.b16 %v454
    %v651 = vunpack.c.h.b16 %v454
    %v652 = vunpack.c.l.b16 %v455
    %v653 = vunpack.c.h.b16 %v455
    %v654 = vunpack.c.l.b16 %v456
    %v655 = vunpack.c.h.b16 %v456
    %v656 = vunpack.c.l.b16 %v457
    %v657 = vunpack.c.h.b16 %v457
    %v658 = vunpack.c.l.b16 %v458
    %v659 = vunpack.c.h.b16 %v458
    %v660 = vunpack.c.l.b16 %v459
    %v661 = vunpack.c.h.b16 %v459
    %v662 = vunpack.c.l.b16 %v460
    %v663 = vunpack.c.h.b16 %v460
    %v664 = vunpack.c.l.b16 %v461
    %v665 = vunpack.c.h.b16 %v461
    %v666 = vpack.c.b16 %v540, %v538
    %v667 = vpack.c.b16 %v541, %v539
    %v668 = vpack.c.b16 %v544, %v542
    %v669 = vpack.c.b16 %v545, %v543
    %v670 = vpack.c.b16 %v548, %v546
    %v671 = vpack.c.b16 %v549, %v547
    %v672 = vpack.c.b16 %v552, %v550
    %v673 = vpack.c.b16 %v553, %v551
    %v674 = vpack.c.b16 %v556, %v554
    %v675 = vpack.c.b16 %v557, %v555
    %v676 = vpack.c.b16 %v560, %v558
    %v677 = vpack.c.b16 %v561, %v559
    %v678 = vpack.c.b16 %v564, %v562
    %v679 = vpack.c.b16 %v565, %v563
    %v680 = vpack.c.b16 %v568, %v566
    %v681 = vpack.c.b16 %v569, %v567
    %v682 = vpack.c.b16 %v572, %v570
    %v683 = vpack.c.b16 %v573, %v571
    %v684 = vpack.c.b16 %v576, %v574
    %v685 = vpack.c.b16 %v577, %v575
    %v686 = vpack.c.b16 %v580, %v578
    %v687 = vpack.c.b16 %v581, %v579
    %v688 = vpack.c.b16 %v584, %v582
    %v689 = vpack.c.b16 %v585, %v583
    %v690 = vpack.c.b16 %v588, %v586
    %v691 = vpack.c.b16 %v589, %v587
    %v692 = vpack.c.b16 %v592, %v590
    %v693 = vpack.c.b16 %v593, %v591
    %v694 = vpack.c.b16 %v596, %v594
    %v695 = vpack.c.b16 %v597, %v595
    %v696 = vpack.c.b16 %v600, %v598
    %v697 = vpack.c.b16 %v601, %v599
    %v698 = vpack.c.b16 %v604, %v602
    %v699 = vpack.c.b16 %v605, %v603
    %v700 = vpack.c.b16 %v608, %v606
    %v701 = vpack.c.b16 %v609, %v607
    %v702 = vpack.c.b16 %v612, %v610
    %v703 = vpack.c.b16 %v613, %v611
    %v704 = vpack.c.b16 %v616, %v614
    %v705 = vpack.c.b16 %v617, %v615
    %v706 = vpack.c.b16 %v620, %v618
    %v707 = vpack.c.b16 %v621, %v619
    %v708 = vpack.c.b16 %v624, %v622
    %v709 = vpack.c.b16 %v625, %v623
    %v710 = vpack.c.b16 %v628, %v626
    %v711 = vpack.c.b16 %v629, %v627
    %v712 = vpack.c.b16 %v632, %v630
    %v713 = vpack.c.b16 %v633, %v631
    %v714 = vpack.c.b16 %v636, %v634
    %v715 = vpack.c.b16 %v637, %v635
    %v716 = vpack.c.b16 %v640, %v638
    %v717 = vpack.c.b16 %v641, %v639
    %v718 = vpack.c.b16 %v644, %v642
    %v719 = vpack.c.b16 %v645, %v643
    %v720 = vpack.c.b16 %v648, %v646
    %v721 = vpack.c.b16 %v649, %v647
    %v722 = vpack.c.b16 %v652, %v650
    %v723 = vpack.c.b16 %v653, %v651
    %v724 = vpack.c.b16 %v656, %v654
    %v725 = vpack.c.b16 %v657, %v655
    %v726 = vpack.c.b16 %v660, %v658
    %v727 = vpack.c.b16 %v661, %v659
    %v728 = vpack.c.b16 %v664, %v662
    %v729 = vpack.c.b16 %v665, %v663
    %794 = vmatprep.subr.bf16.mxu0 %v667
    %795 = vmatpush1.bf16.msra.mxu0 %v666
    %796 = vmatprep.subr.bf16.mxu0 %v669
    %797 = vmatpush1.bf16.msra.mxu0 %v668
    %798 = vmatprep.subr.bf16.mxu0 %v671
    %799 = vmatpush1.bf16.msra.mxu0 %v670
    %800 = vmatprep.subr.bf16.mxu0 %v673
    %801 = vmatpush1.bf16.msra.mxu0 %v672
    %802 = vmatprep.subr.bf16.mxu0 %v675
    %803 = vmatpush1.bf16.msra.mxu0 %v674
    %804 = vmatprep.subr.bf16.mxu0 %v677
    %805 = vmatpush1.bf16.msra.mxu0 %v676
    %806 = vmatprep.subr.bf16.mxu0 %v679
    %807 = vmatpush1.bf16.msra.mxu0 %v678
    %808 = vmatprep.subr.bf16.mxu0 %v681
    %809 = vmatpush1.bf16.msra.mxu0 %v680
    %810 = vmatprep.subr.bf16.mxu0 %v683
    %811 = vmatpush1.bf16.msra.mxu0 %v682
    %812 = vmatprep.subr.bf16.mxu0 %v685
    %813 = vmatpush1.bf16.msra.mxu0 %v684
    %814 = vmatprep.subr.bf16.mxu0 %v687
    %815 = vmatpush1.bf16.msra.mxu0 %v686
    %816 = vmatprep.subr.bf16.mxu0 %v689
    %817 = vmatpush1.bf16.msra.mxu0 %v688
    %818 = vmatprep.subr.bf16.mxu0 %v691
    %819 = vmatpush1.bf16.msra.mxu0 %v690
    %820 = vmatprep.subr.bf16.mxu0 %v693
    %821 = vmatpush1.bf16.msra.mxu0 %v692
    %822 = vmatprep.subr.bf16.mxu0 %v695
    %823 = vmatpush1.bf16.msra.mxu0 %v694
    %824 = vmatprep.subr.bf16.mxu0 %v697
    %825 = vmatpush1.bf16.msra.mxu0 %v696
    %826 = vmatprep.mubr.bf16.mxu0 %v395
    %827 = vmatmul.mubr.bf16.gmra.mrb[0].mxu0 %v394
    %v828 = vpop.f32.mrb[0].mxu0
    %v829 = vadd.f32 %v467, %v828
    %v830 = vpop.f32.mrb[0].mxu0
    %v831 = vadd.f32 %v471, %v830
    %v832 = vpop.f32.mrb[0].mxu0
    %v833 = vpop.f32.mrb[0].mxu0
    %834 = vdwg.mxu0
    %835 = vmatprep.subr.bf16.mxu0 %v699
    %836 = vmatpush1.bf16.msra.mxu0 %v698
    %837 = vmatprep.subr.bf16.mxu0 %v701
    %838 = vmatpush1.bf16.msra.mxu0 %v700
    %839 = vmatprep.subr.bf16.mxu0 %v703
    %840 = vmatpush1.bf16.msra.mxu0 %v702
    %841 = vmatprep.subr.bf16.mxu0 %v705
    %842 = vmatpush1.bf16.msra.mxu0 %v704
    %843 = vmatprep.subr.bf16.mxu0 %v707
    %844 = vmatpush1.bf16.msra.mxu0 %v706
    %845 = vmatprep.subr.bf16.mxu0 %v709
    %846 = vmatpush1.bf16.msra.mxu0 %v708
    %847 = vmatprep.subr.bf16.mxu0 %v711
    %848 = vmatpush1.bf16.msra.mxu0 %v710
    %849 = vmatprep.subr.bf16.mxu0 %v713
    %850 = vmatpush1.bf16.msra.mxu0 %v712
    %851 = vmatprep.subr.bf16.mxu0 %v715
    %852 = vmatpush1.bf16.msra.mxu0 %v714
    %853 = vmatprep.subr.bf16.mxu0 %v717
    %854 = vmatpush1.bf16.msra.mxu0 %v716
    %855 = vmatprep.subr.bf16.mxu0 %v719
    %856 = vmatpush1.bf16.msra.mxu0 %v718
    %857 = vmatprep.subr.bf16.mxu0 %v721
    %858 = vmatpush1.bf16.msra.mxu0 %v720
    %859 = vmatprep.subr.bf16.mxu0 %v723
    %860 = vmatpush1.bf16.msra.mxu0 %v722
    %861 = vmatprep.subr.bf16.mxu0 %v725
    %862 = vmatpush1.bf16.msra.mxu0 %v724
    %863 = vmatprep.subr.bf16.mxu0 %v727
    %864 = vmatpush1.bf16.msra.mxu0 %v726
    %865 = vmatprep.subr.bf16.mxu0 %v729
    %866 = vmatpush1.bf16.msra.mxu0 %v728
    %867 = vmatprep.mubr.bf16.mxu0 %v397
    %868 = vmatmul.mubr.bf16.gmra.mrb[0].mxu0 %v396
    %v869 = vpop.f32.mrb[0].mxu0
    %v870 = vadd.f32 %v829, %v869
    %v871 = vpop.f32.mrb[0].mxu0
    %v872 = vadd.f32 %v831, %v871
    %v873 = vpop.f32.mrb[0].mxu0
    %v874 = vpop.f32.mrb[0].mxu0
    %875 = vdwg.mxu0
    %v876 = vmul.f32 %v870, 0.2
    %v877 = vmul.f32 %v872, 0.2
    %v878 = vmax.f32 %v870, %v876
    %v879 = vmax.f32 %v872, %v877
    %v880 = vpack.c.bf16 %v878, %v878
    %v881 = vpack.c.bf16 %v879, %v879
    %v882 = vld [vmem:[#allocation9] sm:$0xf]
    %v883 = vld [vmem:[#allocation9 + $0x4] sm:$0xf]
    %v884 = vld [vmem:[#allocation9 + $0x8] sm:$0xf]
    %v885 = vld [vmem:[#allocation9 + $0xc] sm:$0xf]
    %v886 = vld [vmem:[#allocation9 + $0x10] sm:$0xf]
    %v887 = vld [vmem:[#allocation9 + $0x14] sm:$0xf]
    %v888 = vld [vmem:[#allocation9 + $0x18] sm:$0xf]
    %v889 = vld [vmem:[#allocation9 + $0x1c] sm:$0xf]
    %v890 = vld [vmem:[#allocation9 + $0x20] sm:$0xf]
    %v891 = vld [vmem:[#allocation9 + $0x24] sm:$0xf]
    %v892 = vld [vmem:[#allocation9 + $0x28] sm:$0xf]
    %v893 = vld [vmem:[#allocation9 + $0x2c] sm:$0xf]
    %v894 = vld [vmem:[#allocation9 + $0x30] sm:$0xf]
    %v895 = vld [vmem:[#allocation9 + $0x34] sm:$0xf]
    %v896 = vld [vmem:[#allocation9 + $0x38] sm:$0xf]
    %v897 = vld [vmem:[#allocation9 + $0x3c] sm:$0xf]
    %v898 = vld [vmem:[#allocation9 + $0x40] sm:$0xf]
    %v899 = vld [vmem:[#allocation9 + $0x44] sm:$0xf]
    %v900 = vld [vmem:[#allocation9 + $0x48] sm:$0xf]
    %v901 = vld [vmem:[#allocation9 + $0x4c] sm:$0xf]
    %v902 = vld [vmem:[#allocation9 + $0x50] sm:$0xf]
    %v903 = vld [vmem:[#allocation9 + $0x54] sm:$0xf]
    %v904 = vld [vmem:[#allocation9 + $0x58] sm:$0xf]
    %v905 = vld [vmem:[#allocation9 + $0x5c] sm:$0xf]
    %v906 = vld [vmem:[#allocation9 + $0x60] sm:$0xf]
    %v907 = vld [vmem:[#allocation9 + $0x64] sm:$0xf]
    %v908 = vld [vmem:[#allocation9 + $0x68] sm:$0xf]
    %v909 = vld [vmem:[#allocation9 + $0x6c] sm:$0xf]
    %v910 = vld [vmem:[#allocation9 + $0x70] sm:$0xf]
    %v911 = vld [vmem:[#allocation9 + $0x74] sm:$0xf]
    %v912 = vld [vmem:[#allocation9 + $0x78] sm:$0xf]
    %v913 = vld [vmem:[#allocation9 + $0x7c] sm:$0xf]
    %v914 = vld [vmem:[%s6] sm:$0x1]
    %v916 = vlaneseq
    %v917 = vshrl.u32 %v916, 7
    %v918 = vsub.s32 0, %v917
    %v919 = vrot.slane %v914, %v918
    %v953 = vunpack.c.l.b16 %v882
    %v954 = vunpack.c.l.b16 %v883
    %v955 = vunpack.c.l.b16 %v884
    %v956 = vunpack.c.l.b16 %v885
    %v957 = vunpack.c.l.b16 %v886
    %v958 = vunpack.c.l.b16 %v887
    %v959 = vunpack.c.l.b16 %v888
    %v960 = vunpack.c.l.b16 %v889
    %v961 = vunpack.c.l.b16 %v890
    %v962 = vunpack.c.l.b16 %v891
    %v963 = vunpack.c.l.b16 %v892
    %v964 = vunpack.c.l.b16 %v893
    %v965 = vunpack.c.l.b16 %v894
    %v966 = vunpack.c.l.b16 %v895
    %v967 = vunpack.c.l.b16 %v896
    %v968 = vunpack.c.l.b16 %v897
    %v969 = vunpack.c.l.b16 %v898
    %v970 = vunpack.c.l.b16 %v899
    %v971 = vunpack.c.l.b16 %v900
    %v972 = vunpack.c.l.b16 %v901
    %v973 = vunpack.c.l.b16 %v902
    %v974 = vunpack.c.l.b16 %v903
    %v975 = vunpack.c.l.b16 %v904
    %v976 = vunpack.c.l.b16 %v905
    %v977 = vunpack.c.l.b16 %v906
    %v978 = vunpack.c.l.b16 %v907
    %v979 = vunpack.c.l.b16 %v908
    %v980 = vunpack.c.l.b16 %v909
    %v981 = vunpack.c.l.b16 %v910
    %v982 = vunpack.c.l.b16 %v911
    %v983 = vunpack.c.l.b16 %v912
    %v984 = vunpack.c.l.b16 %v913
    %v985 = vpack.c.b16 %v954, %v953
    %v986 = vpack.c.b16 %v956, %v955
    %v987 = vpack.c.b16 %v958, %v957
    %v988 = vpack.c.b16 %v960, %v959
    %v989 = vpack.c.b16 %v962, %v961
    %v990 = vpack.c.b16 %v964, %v963
    %v991 = vpack.c.b16 %v966, %v965
    %v992 = vpack.c.b16 %v968, %v967
    %v993 = vpack.c.b16 %v970, %v969
    %v994 = vpack.c.b16 %v972, %v971
    %v995 = vpack.c.b16 %v974, %v973
    %v996 = vpack.c.b16 %v976, %v975
    %v997 = vpack.c.b16 %v978, %v977
    %v998 = vpack.c.b16 %v980, %v979
    %v999 = vpack.c.b16 %v982, %v981
    %v1000 = vpack.c.b16 %v984, %v983
    %1017 = vmatprep.subr.bf16.mxu0 0
    %1018 = vmatpush1.bf16.msra.mxu0 %v985
    %1019 = vmatprep.subr.bf16.mxu0 0
    %1020 = vmatpush1.bf16.msra.mxu0 %v986
    %1021 = vmatprep.subr.bf16.mxu0 0
    %1022 = vmatpush1.bf16.msra.mxu0 %v987
    %1023 = vmatprep.subr.bf16.mxu0 0
    %1024 = vmatpush1.bf16.msra.mxu0 %v988
    %1025 = vmatprep.subr.bf16.mxu0 0
    %1026 = vmatpush1.bf16.msra.mxu0 %v989
    %1027 = vmatprep.subr.bf16.mxu0 0
    %1028 = vmatpush1.bf16.msra.mxu0 %v990
    %1029 = vmatprep.subr.bf16.mxu0 0
    %1030 = vmatpush1.bf16.msra.mxu0 %v991
    %1031 = vmatprep.subr.bf16.mxu0 0
    %1032 = vmatpush1.bf16.msra.mxu0 %v992
    %1033 = vmatprep.subr.bf16.mxu0 0
    %1034 = vmatpush1.bf16.msra.mxu0 %v993
    %1035 = vmatprep.subr.bf16.mxu0 0
    %1036 = vmatpush1.bf16.msra.mxu0 %v994
    %1037 = vmatprep.subr.bf16.mxu0 0
    %1038 = vmatpush1.bf16.msra.mxu0 %v995
    %1039 = vmatprep.subr.bf16.mxu0 0
    %1040 = vmatpush1.bf16.msra.mxu0 %v996
    %1041 = vmatprep.subr.bf16.mxu0 0
    %1042 = vmatpush1.bf16.msra.mxu0 %v997
    %1043 = vmatprep.subr.bf16.mxu0 0
    %1044 = vmatpush1.bf16.msra.mxu0 %v998
    %1045 = vmatprep.subr.bf16.mxu0 0
    %1046 = vmatpush1.bf16.msra.mxu0 %v999
    %1047 = vmatprep.subr.bf16.mxu0 0
    %1048 = vmatpush1.bf16.msra.mxu0 %v1000
    %1049 = vmatprep.mubr.bf16.mxu0 %v881
    %1050 = vmatmul.mubr.bf16.gmra.mrb[0].mxu0 %v880
    %v1051 = vpop.f32.mrb[0].mxu0
    %v1052 = vadd.f32 %v919, %v1051
    %v1053 = vpop.f32.mrb[0].mxu0
    %v1054 = vpop.f32.mrb[0].mxu0
    %v1055 = vpop.f32.mrb[0].mxu0
    %1056 = vdwg.mxu0
    %v1057 = vmul.f32 %v1052, 0.2
    %v1058 = vmax.f32 %v1052, %v1057
    %v1059 = vld [vmem:[%s7] sm:$0x1]
    %v1061 = vlaneseq
    %v1062 = vshrl.u32 %v1061, 7
    %v1063 = vsub.s32 0, %v1062
    %v1064 = vrot.slane %v1059, %v1063
    %v1066 = vmul.f32 %v1058, %v1064
    %1067 = vadd.xlane.f32.xlu0 %v1066
    %v1068 = vpop.xlane.xlu0 %1067
    %1069 = vxpose.xlu0.b32.start [1/16] %v1068, 128
    %1070 = vxpose.xlu0.b32.cont [2/16] 0.0, 128
    %1071 = vxpose.xlu0.b32.cont [3/16] 0.0, 128
    %1072 = vxpose.xlu0.b32.cont [4/16] 0.0, 128
    %1073 = vxpose.xlu0.b32.cont [5/16] 0.0, 128
    %1074 = vxpose.xlu0.b32.cont [6/16] 0.0, 128
    %1075 = vxpose.xlu0.b32.cont [7/16] 0.0, 128
    %1076 = vxpose.xlu0.b32.cont [8/16] 0.0, 128
    %1077 = vxpose.xlu0.b32.cont [9/16] 0.0, 128
    %1078 = vxpose.xlu0.b32.cont [10/16] 0.0, 128
    %1079 = vxpose.xlu0.b32.cont [11/16] 0.0, 128
    %1080 = vxpose.xlu0.b32.cont [12/16] 0.0, 128
    %1081 = vxpose.xlu0.b32.cont [13/16] 0.0, 128
    %1082 = vxpose.xlu0.b32.cont [14/16] 0.0, 128
    %1083 = vxpose.xlu0.b32.cont [15/16] 0.0, 128
    %1084 = vxpose.xlu0.b32.end [16/16] 0.0, 128
    %v1085 = vpop.trf.xlu0
    %v1086 = vpop.trf.xlu0
    %v1087 = vpop.trf.xlu0
    %v1088 = vpop.trf.xlu0
    %v1089 = vpop.trf.xlu0
    %v1090 = vpop.trf.xlu0
    %v1091 = vpop.trf.xlu0
    %v1092 = vpop.trf.xlu0
    %v1093 = vpop.trf.xlu0
    %v1094 = vpop.trf.xlu0
    %v1095 = vpop.trf.xlu0
    %v1096 = vpop.trf.xlu0
    %v1097 = vpop.trf.xlu0
    %v1098 = vpop.trf.xlu0
    %v1099 = vpop.trf.xlu0
    %v1100 = vpop.trf.xlu0
    %v1101 = vld [vmem:[#allocation2] sm:$0x1]
    %1103 = vset.pattern.permute.xlu0 0
    %1104 = vperm.xlu0 %1103, %v1101
    %v1105 = vpop.permute.xlu0 %1104
    %v1107 = vlaneseq
    %v1108 = vshrl.u32 %v1107, 7
    %v1109 = vsub.s32 0, %v1108
    %v1110 = vrot.slane %v1105, %v1109
    %v1111 = vadd.f32 %v1085, %v1110
    %vm1112 = vcmask 57344
    %1113 = vst.msk [vmem:[#allocation11] sm:$0x1] %vm1112, %v1111
    // Predicated region
    $region54: #{tpu_custom_call.1} parent=1 // pred_check
      _
    $region55: #{tpu_custom_call.1} parent=1 // pred_check_branch
      %1115 = sbr.rel (0) target = $region57
    $region56: #{tpu_custom_call.1} parent=1 // pred_region
      %s1117 = ssub.s32 16, 16
      %1118 = vsyncadd [#allocation5], %s1117
      %s1120 = sshll.u32 [#allocation11], 4
      %s1121 = int_to_ptr.vmem [resolvable:$true] %s1120
      %1123 = dma.vmem_to_hbm [thread:$0]  %s1121, 16, %s9, [#allocation5]
    $region57: #{tpu_custom_call.1} parent=1 // pred_fallthru
      _
    // Predicated region
    $region58: #{tpu_custom_call.1} parent=1 // pred_check
      _
    $region59: #{tpu_custom_call.1} parent=1 // pred_check_branch
      %1125 = sbr.rel (0) target = $region61
    $region60: #{tpu_custom_call.1} parent=1 // pred_region
      %1126 = dma.done [#allocation5], 16
    $region61: #{tpu_custom_call.1} parent=1 // pred_fallthru
      _
    %1127 = vsyncpa [#allocation4], 1
    %1128 = vsyncpa [#allocation7], 1
    %1129 = vsyncpa [#allocation10], 1
    %1130 = vsyncpa [#allocation5], 1

</llo_original>
